<compile_context>
chip_gen: v7x
topology: tpu7x:2x2x1
jax: 0.10.0
libtpu: 0.0.40
codegen_flags: <defaults>
</compile_context>

<pallas_src>
import math
from functools import partial

import jax
import jax.numpy as jnp
from jax.experimental import pallas as pl
from jax.experimental.pallas import tpu as pltpu

VMEM_SPEC = pl.BlockSpec(memory_space=pltpu.MemorySpace.VMEM)

# bf16 storage / MXU operands only when actually running on TPU hardware; the
# CPU/interpret path (XLA:CPU DotThunk) has no BF16xBF16=F32 dot, so there we
# keep everything f32.  On TPU this halves the O(N^2) adjacency HBM traffic and
# runs the aggregation matmul in fast bf16 MXU mode (f32 accumulate).
_ON_TPU = jax.default_backend() == "tpu"
_MM_DTYPE = jnp.bfloat16 if _ON_TPU else jnp.float32


def _tiling_for_device():
    # v7x-safe default: 64 MiB physical VMEM -> 256-row tile, 48 MiB budget.
    # With bf16 A + a hoisted bf16 hs slab this double-buffers to N ~ 32K.
    tile, vmem = 256, 48 * 1024 * 1024
    if _ON_TPU:
        try:
            info = pltpu.get_tpu_info()
            # v5e / v6e have 128 MiB VMEM: bigger row tiles + higher budget
            # amortize the ~0.35us/step pipeline overhead (closer to roofline).
            if getattr(info, "vmem_capacity_bytes", 0) >= 96 * 1024 * 1024:
                tile, vmem = 512, 96 * 1024 * 1024
        except Exception:
            pass
    return tile, vmem


_TILE_ROWS, _VMEM_LIMIT = _tiling_for_device()


def _row_tile(n):
    """Adjacency row-tile size.

    Keeps the lane-dense (1, tn) score block 128-aligned, guarantees >= 2 grid
    steps whenever N > 128 so dimension_semantics=("parallel",) can use both
    v7x TensorCores, and caps at _TILE_ROWS for the VMEM budget.
    """
    if n <= 128:
        return n
    tn = 128 * pl.cdiv(pl.cdiv(n, 2), 128)
    return min(tn, _TILE_ROWS)


# ----------------- hoisted per-layer transform: hs = D^-1/2 (X @ W) ---------
def _xw_scale_kernel(x_ref, w_ref, d_ref, hs_ref):
    if w_ref.shape[0] == 1:
        # GCNConv(1, 128): a K=1 matmul is pure MXU fill/drain -> VPU outer
        # product instead.
        h = x_ref[...] * w_ref[...]
    else:
        h = jnp.dot(x_ref[...].astype(_MM_DTYPE), w_ref[...].astype(_MM_DTYPE),
                    preferred_element_type=jnp.float32)
    hs_ref[...] = (d_ref[...] * h).astype(hs_ref.dtype)


def xw_scale(x, w, dinv):
    n, c_in = x.shape
    c_out = w.shape[1]
    tm = _row_tile(n)
    return pl.pallas_call(
        _xw_scale_kernel,
        out_shape=jax.ShapeDtypeStruct((n, c_out), _MM_DTYPE),
        grid_spec=pltpu.PrefetchScalarGridSpec(
            num_scalar_prefetch=0,
            grid=(pl.cdiv(n, tm),),
            in_specs=[pl.BlockSpec((tm, c_in), lambda i: (i, 0)),     # X rows
                      pl.BlockSpec((c_in, c_out), lambda i: (0, 0)),  # W
                      pl.BlockSpec((tm, 1), lambda i: (i, 0))],       # D^-1/2
            out_specs=pl.BlockSpec((tm, c_out), lambda i: (i, 0))),
        compiler_params=pltpu.CompilerParams(
            dimension_semantics=("parallel",),
            vmem_limit_bytes=_VMEM_LIMIT),
    )(x, w, dinv)


# ----------- row-tiled GCN aggregation + ReLU + TopKPooling score -----------
def _agg_score_kernel(a_ref, hsf_ref, hsr_ref, dr_ref, b_ref, p_ref,
                      out_ref, score_ref):
    # Normalized aggregation without materializing (A+I) or its normalization:
    #   out = D^-1/2 A (D^-1/2 h) + D^-1 h + b = dr * (A @ hs + hs_rows) + b
    # (deg = rowsum(A) + 1).  A (0/1) and hs are bf16 on TPU -> bf16 MXU matmul
    # with f32 accumulate; elementwise scaling stays f32 on the VPU (v5e-safe).
    agg = jnp.dot(a_ref[...], hsf_ref[...], preferred_element_type=jnp.float32)
    out = dr_ref[...] * (agg + hsr_ref[...].astype(jnp.float32)) + b_ref[...]
    out = jnp.maximum(out, 0.0)                         # F.relu
    out_ref[...] = out

    # TopKPooling score computed exactly once, emitted as a lane-dense [1, tn]
    # slab (unmasked vst) for the JAX top-k glue; the x[perm] * score[perm]
    # gating happens after pooling on the k-subset (smaller than N).
    p = p_ref[...]                                      # [1, Cout]
    inv_norm = jax.lax.rsqrt(jnp.sum(p * p, keepdims=True))
    p8 = jnp.broadcast_to(p, (8, p.shape[1]))           # native 8-sublane lhs
    s = jax.lax.dot_general(p8, out, (((1,), (1,)), ((), ())),
                            preferred_element_type=jnp.float32)
    score_ref[...] = jnp.tanh(s[0:1, :] * inv_norm)


def gcn_agg_score(a, hs, dinv, b, p):
    n = a.shape[0]
    c_out = hs.shape[1]
    tn = _row_tile(n)
    # NOTE: the grid-invariant inputs (hs full, bias, pool weight) could be
    # single-buffered (pipeline_mode) to reclaim VMEM at very large N.
    return pl.pallas_call(
        _agg_score_kernel,
        out_shape=(jax.ShapeDtypeStruct((n, c_out), jnp.float32),   # relu(conv)
                   jax.ShapeDtypeStruct((1, n), jnp.float32)),      # pool score
        grid_spec=pltpu.PrefetchScalarGridSpec(
            num_scalar_prefetch=0,
            grid=(pl.cdiv(n, tn),),
            in_specs=[
                pl.BlockSpec((tn, n), lambda i: (i, 0)),        # A row tile
                pl.BlockSpec((n, c_out), lambda i: (0, 0)),     # hs (all rows)
                pl.BlockSpec((tn, c_out), lambda i: (i, 0)),    # hs (tile rows)
                pl.BlockSpec((tn, 1), lambda i: (i, 0)),        # D^-1/2 (rows)
                pl.BlockSpec((1, c_out), lambda i: (0, 0)),     # bias
                pl.BlockSpec((1, c_out), lambda i: (0, 0)),     # pool weight
            ],
            out_specs=(pl.BlockSpec((tn, c_out), lambda i: (i, 0)),
                       pl.BlockSpec((1, tn), lambda i: (0, i)))),
        compiler_params=pltpu.CompilerParams(
            dimension_semantics=("parallel",),      # shards row tiles over TCs
            vmem_limit_bytes=_VMEM_LIMIT),
    )(a, hs, hs, dinv, b, p)


# --------------------- TopK selection glue (plain JAX) ----------------------
def _topk_select(score, x_conv, a, n_per_graph, ratio):
    n = x_conv.shape[0]
    num_graphs = n // n_per_graph
    k = int(math.ceil(ratio * n_per_graph))
    score_g = score.reshape(num_graphs, n_per_graph)
    top_s, idx = jax.lax.top_k(score_g, k)              # no full argsort
    perm = (idx + (jnp.arange(num_graphs) * n_per_graph)[:, None]).reshape(-1)
    # TopKPooling gate applied on the pooled subset: x[perm] * score[perm]
    x_new = jnp.take(x_conv, perm, axis=0) * top_s.reshape(-1, 1)
    # TODO(synk): at large N this double gather should become a scalar-prefetch
    # (PrefetchScalarGridSpec) Pallas DMA gather emitting the kxk block directly
    # (fused with the next layer's degree rowsum).  It already moves half the
    # bytes here because the adjacency is stored bf16 on TPU.
    a_new = jnp.take(jnp.take(a, perm, axis=0), perm, axis=1)
    return x_new, a_new, k


# ------------------ global max pool + global mean pool ----------------------
def _readout_kernel(x_ref, o_ref):
    x = x_ref[...]                                      # [Gt, k, C]
    c = x.shape[2]
    inv_k = 1.0 / x.shape[1]                            # static graph size
    o_ref[:, :c] = jnp.max(x, axis=1)                   # gmp
    o_ref[:, c:] = jnp.sum(x, axis=1) * inv_k           # gap


def readout(x, n_per_graph, graphs_per_step=8):
    n, c = x.shape
    num_graphs = n // n_per_graph
    x3 = x.reshape(num_graphs, n_per_graph, c)          # graphs are contiguous
    gt = min(num_graphs, graphs_per_step)               # batch graphs per step
    return pl.pallas_call(
        _readout_kernel,
        out_shape=jax.ShapeDtypeStruct((num_graphs, 2 * c), jnp.float32),
        grid_spec=pltpu.PrefetchScalarGridSpec(
            num_scalar_prefetch=0,
            grid=(pl.cdiv(num_graphs, gt),),
            in_specs=[pl.BlockSpec((gt, n_per_graph, c), lambda g: (g, 0, 0))],
            out_specs=pl.BlockSpec((gt, 2 * c), lambda g: (g, 0))),
        compiler_params=pltpu.CompilerParams(
            dimension_semantics=("parallel",)),
    )(x3)


# --------------------------------- MLP head ---------------------------------
def _mlp_kernel(x_ref, w1_ref, b1_ref, w2_ref, b2_ref, w3_ref, b3_ref, o_ref):
    h = jnp.dot(x_ref[...].astype(_MM_DTYPE), w1_ref[...].astype(_MM_DTYPE),
                preferred_element_type=jnp.float32) + b1_ref[...]
    h = jnp.maximum(h, 0.0)
    # F.dropout(p=1, training=False) is the identity at inference; the training
    # path (which would zero everything) is intentionally not implemented.
    h = jnp.dot(h.astype(_MM_DTYPE), w2_ref[...].astype(_MM_DTYPE),
                preferred_element_type=jnp.float32) + b2_ref[...]
    h = jnp.maximum(h, 0.0)
    # lin3 has one output unit: lane reduction instead of a 1-column MXU matmul
    # (w3 is stored as a [1, 64] row).
    o_ref[...] = jnp.sum(h * w3_ref[...], axis=1, keepdims=True) + b3_ref[...]


def mlp_head(x, params):
    bsz = x.shape[0]
    return pl.pallas_call(
        _mlp_kernel,
        out_shape=jax.ShapeDtypeStruct((bsz, 1), jnp.float32),
        in_specs=[VMEM_SPEC] * 7,
        out_specs=VMEM_SPEC,
    )(x, params["lin1_w"], params["lin1_b"],
      params["lin2_w"], params["lin2_b"],
      params["lin3_w"], params["lin3_b"])


# ------------------------------- full forward -------------------------------
@partial(jax.jit, static_argnums=(2,))
def net_forward(x, a, n_per_graph, params, ratio=0.8):
    # Narrow adjacency storage (bf16 on TPU): A is the only O(N^2) operand and
    # the per-layer kernel is HBM-bandwidth bound.
    a = a.astype(_MM_DTYPE)

    def gcn_pool(x, a, npg, w, b, p):
        # degree of (A+I) as a cheap JAX reduction (glue between Pallas calls)
        dinv = jax.lax.rsqrt(
            jnp.sum(a, axis=1, keepdims=True, dtype=jnp.float32) + 1.0)
        hs = xw_scale(x, w, dinv)                 # hoisted, once per layer
        conv, score = gcn_agg_score(a, hs, dinv, b, p)
        return _topk_select(score, conv, a, npg, ratio)

    x, a, npg = gcn_pool(x, a, n_per_graph,
                         params["gcn1_w"], params["gcn1_b"], params["pool1_p"])
    x1 = readout(x, npg)
    x, a, npg = gcn_pool(x, a, npg,
                         params["gcn2_w"], params["gcn2_b"], params["pool2_p"])
    x2 = readout(x, npg)
    x, a, npg = gcn_pool(x, a, npg,
                         params["gcn3_w"], params["gcn3_b"], params["pool3_p"])
    x3 = readout(x, npg)
    xs = x1 + x2 + x3                                   # [B, 256]
    return mlp_head(xs, params)                         # [B, 1]


# ------------------------------ parameter init ------------------------------
def init_params(key):
    ks = jax.random.split(key, 12)

    def w(k, shape, scale=0.1):
        return jax.random.normal(k, shape, jnp.float32) * scale

    return dict(
        gcn1_w=w(ks[0], (1, 128)),   gcn1_b=jnp.zeros((1, 128), jnp.float32),
        pool1_p=w(ks[1], (1, 128)),
        gcn2_w=w(ks[2], (128, 128)), gcn2_b=jnp.zeros((1, 128), jnp.float32),
        pool2_p=w(ks[3], (1, 128)),
        gcn3_w=w(ks[4], (128, 128)), gcn3_b=jnp.zeros((1, 128), jnp.float32),
        pool3_p=w(ks[5], (1, 128)),
        lin1_w=w(ks[6], (256, 128)), lin1_b=w(ks[7], (1, 128)),
        lin2_w=w(ks[8], (128, 64)),  lin2_b=w(ks[9], (1, 64)),
        lin3_w=w(ks[10], (1, 64)),   lin3_b=w(ks[11], (1, 1)),
    )


if __name__ == "__main__":
    key = jax.random.PRNGKey(0)
    k_x, k_a, k_p = jax.random.split(key, 3)

    num_graphs, n_per_graph = 2, 16
    n_nodes = num_graphs * n_per_graph

    # node features (GCNConv(1, 128) => 1 input channel)
    x = jax.random.normal(k_x, (n_nodes, 1), jnp.float32)

    # random symmetric block-diagonal adjacency (no self loops; kernel adds them)
    rand = jax.random.uniform(k_a, (n_nodes, n_nodes))
    adj = ((rand + rand.T) > 1.2).astype(jnp.float32)
    node = jnp.arange(n_nodes)
    same_graph = (node[:, None] // n_per_graph) == (node[None, :] // n_per_graph)
    adj = adj * same_graph.astype(jnp.float32)
    adj = adj * (1.0 - jnp.eye(n_nodes, dtype=jnp.float32))

    params = init_params(k_p)
    out = net_forward(x, adj, n_per_graph, params)
    out = jax.block_until_ready(out)
    assert out.shape == (num_graphs, 1) and out.dtype == jnp.float32
    print("KERNEL_OK")
</pallas_src>

<mosaic_0001>
module attributes {stable_mosaic.version = 11 : i64} {
  func.func @_xw_scale_kernel(%arg0: i32, %arg1: memref<32x1xf32, #tpu.memory_space<vmem>>, %arg2: memref<1x128xf32, #tpu.memory_space<vmem>>, %arg3: memref<32x1xf32, #tpu.memory_space<vmem>>, %arg4: memref<32x128xf32, #tpu.memory_space<vmem>>) attributes {dimension_semantics = [#tpu.dimension_semantics<parallel>], iteration_bounds = array<i64: 1>, scalar_prefetch = 0 : i64, scratch_operands = 0 : i64, tpu.core_type = #tpu.core_type<tc>, window_params = [{transform_indices = @transform_0, window_bounds = array<i64: 32, 1>}, {pipeline_mode = #tpu.pipeline_mode<synchronous>, transform_indices = @transform_1, window_bounds = array<i64: 1, 128>}, {transform_indices = @transform_2, window_bounds = array<i64: 32, 1>}, {transform_indices = @transform_3, window_bounds = array<i64: 32, 128>}]} {
    %c0 = arith.constant 0 : index
    %c0_0 = arith.constant 0 : index
    %0 = vector.load %arg1[%c0, %c0_0] : memref<32x1xf32, #tpu.memory_space<vmem>>, vector<32x1xf32>
    %c0_1 = arith.constant 0 : index
    %c0_2 = arith.constant 0 : index
    %1 = vector.load %arg2[%c0_1, %c0_2] : memref<1x128xf32, #tpu.memory_space<vmem>>, vector<1x128xf32>
    %2 = vector.broadcast %0 : vector<32x1xf32> to vector<32x128xf32>
    %3 = vector.broadcast %1 : vector<1x128xf32> to vector<32x128xf32>
    %4 = arith.mulf %2, %3 : vector<32x128xf32>
    %c0_3 = arith.constant 0 : index
    %c0_4 = arith.constant 0 : index
    %5 = vector.load %arg3[%c0_3, %c0_4] : memref<32x1xf32, #tpu.memory_space<vmem>>, vector<32x1xf32>
    %6 = vector.broadcast %5 : vector<32x1xf32> to vector<32x128xf32>
    %7 = arith.mulf %6, %4 : vector<32x128xf32>
    %c0_5 = arith.constant 0 : index
    %c0_6 = arith.constant 0 : index
    %8 = vector.load %arg4[%c0_5, %c0_6] : memref<32x128xf32, #tpu.memory_space<vmem>>, vector<32x128xf32>
    tpu.vector_store %arg4[%c0_5, %c0_6], %7 {strides = array<i32>} : memref<32x128xf32, #tpu.memory_space<vmem>>, vector<32x128xf32>,
    return
  }
  func.func @transform_0(%arg0: i32) -> (i32, i32) {
    %c0_i32 = arith.constant 0 : i32
    %c0_i32_0 = arith.constant 0 : i32
    return %arg0, %c0_i32 : i32, i32
  }
  func.func @transform_1(%arg0: i32) -> (i32, i32) {
    %c0_i32 = arith.constant 0 : i32
    %c0_i32_0 = arith.constant 0 : i32
    %c0_i32_1 = arith.constant 0 : i32
    return %c0_i32, %c0_i32_0 : i32, i32
  }
  func.func @transform_2(%arg0: i32) -> (i32, i32) {
    %c0_i32 = arith.constant 0 : i32
    %c0_i32_0 = arith.constant 0 : i32
    return %arg0, %c0_i32 : i32, i32
  }
  func.func @transform_3(%arg0: i32) -> (i32, i32) {
    %c0_i32 = arith.constant 0 : i32
    %c0_i32_0 = arith.constant 0 : i32
    return %arg0, %c0_i32 : i32, i32
  }
}

module attributes {stable_mosaic.version = 11 : i64} {
  func.func @_agg_score_kernel(%arg0: i32, %arg1: memref<32x32xf32, #tpu.memory_space<vmem>>, %arg2: memref<32x128xf32, #tpu.memory_space<vmem>>, %arg3: memref<32x128xf32, #tpu.memory_space<vmem>>, %arg4: memref<32x1xf32, #tpu.memory_space<vmem>>, %arg5: memref<1x128xf32, #tpu.memory_space<vmem>>, %arg6: memref<1x128xf32, #tpu.memory_space<vmem>>, %arg7: memref<32x128xf32, #tpu.memory_space<vmem>>, %arg8: memref<1x32xf32, #tpu.memory_space<vmem>>) attributes {dimension_semantics = [#tpu.dimension_semantics<parallel>], iteration_bounds = array<i64: 1>, scalar_prefetch = 0 : i64, scratch_operands = 0 : i64, tpu.core_type = #tpu.core_type<tc>, window_params = [{transform_indices = @transform_0, window_bounds = array<i64: 32, 32>}, {pipeline_mode = #tpu.pipeline_mode<synchronous>, transform_indices = @transform_1, window_bounds = array<i64: 32, 128>}, {transform_indices = @transform_2, window_bounds = array<i64: 32, 128>}, {transform_indices = @transform_3, window_bounds = array<i64: 32, 1>}, {pipeline_mode = #tpu.pipeline_mode<synchronous>, transform_indices = @transform_4, window_bounds = array<i64: 1, 128>}, {pipeline_mode = #tpu.pipeline_mode<synchronous>, transform_indices = @transform_5, window_bounds = array<i64: 1, 128>}, {transform_indices = @transform_6, window_bounds = array<i64: 32, 128>}, {transform_indices = @transform_7, window_bounds = array<i64: 1, 32>}]} {
    %c0 = arith.constant 0 : index
    %c0_0 = arith.constant 0 : index
    %0 = vector.load %arg1[%c0, %c0_0] : memref<32x32xf32, #tpu.memory_space<vmem>>, vector<32x32xf32>
    %c0_1 = arith.constant 0 : index
    %c0_2 = arith.constant 0 : index
    %1 = vector.load %arg2[%c0_1, %c0_2] : memref<32x128xf32, #tpu.memory_space<vmem>>, vector<32x128xf32>
    %cst = arith.constant dense<0.000000e+00> : vector<32x128xf32>
    %2 = tpu.matmul %0, %1, %cst {dimension_numbers = #tpu.dot_dimension_numbers<[1], [0], [0], [1], [0, 0, 1, 1], [], []>} : vector<32x32xf32>, vector<32x128xf32>, vector<32x128xf32> -> vector<32x128xf32>
    %c0_3 = arith.constant 0 : index
    %c0_4 = arith.constant 0 : index
    %3 = vector.load %arg4[%c0_3, %c0_4] : memref<32x1xf32, #tpu.memory_space<vmem>>, vector<32x1xf32>
    %c0_5 = arith.constant 0 : index
    %c0_6 = arith.constant 0 : index
    %4 = vector.load %arg3[%c0_5, %c0_6] : memref<32x128xf32, #tpu.memory_space<vmem>>, vector<32x128xf32>
    %5 = arith.addf %2, %4 : vector<32x128xf32>
    %6 = vector.broadcast %3 : vector<32x1xf32> to vector<32x128xf32>
    %7 = arith.mulf %6, %5 : vector<32x128xf32>
    %c0_7 = arith.constant 0 : index
    %c0_8 = arith.constant 0 : index
    %8 = vector.load %arg5[%c0_7, %c0_8] : memref<1x128xf32, #tpu.memory_space<vmem>>, vector<1x128xf32>
    %9 = vector.broadcast %8 : vector<1x128xf32> to vector<32x128xf32>
    %10 = arith.addf %7, %9 : vector<32x128xf32>
    %cst_9 = arith.constant 0.000000e+00 : f32
    %11 = vector.broadcast %cst_9 : f32 to vector<32x128xf32>
    %12 = arith.maximumf %10, %11 : vector<32x128xf32>
    %c0_10 = arith.constant 0 : index
    %c0_11 = arith.constant 0 : index
    %13 = vector.load %arg7[%c0_10, %c0_11] : memref<32x128xf32, #tpu.memory_space<vmem>>, vector<32x128xf32>
    tpu.vector_store %arg7[%c0_10, %c0_11], %12 {strides = array<i32>} : memref<32x128xf32, #tpu.memory_space<vmem>>, vector<32x128xf32>,
    %c0_12 = arith.constant 0 : index
    %c0_13 = arith.constant 0 : index
    %14 = vector.load %arg6[%c0_12, %c0_13] : memref<1x128xf32, #tpu.memory_space<vmem>>, vector<1x128xf32>
    %15 = arith.mulf %14, %14 : vector<1x128xf32>
    %16 = vector.shape_cast %15 : vector<1x128xf32> to vector<1x1x128xf32>
    %cst_14 = arith.constant dense<0.000000e+00> : vector<1xf32>
    %17 = vector.multi_reduction <add>, %16, %cst_14 [1, 2] : vector<1x1x128xf32> to vector<1xf32>
    %18 = vector.shape_cast %17 : vector<1xf32> to vector<1x1x1xf32>
    %19 = vector.extract %18[0, 0, 0] : f32 from vector<1x1x1xf32>
    %20 = vector.broadcast %19 : f32 to vector<1x1xf32>
    %21 = math.rsqrt %20 : vector<1x1xf32>
    %22 = vector.shape_cast %14 : vector<1x128xf32> to vector<1x128xf32>
    %23 = vector.broadcast %22 : vector<1x128xf32> to vector<8x128xf32>
    %cst_15 = arith.constant dense<0.000000e+00> : vector<8x32xf32>
    %24 = tpu.matmul %23, %12, %cst_15 {dimension_numbers = #tpu.dot_dimension_numbers<[1], [1], [0], [0], [0, 0, 1, 0], [], []>} : vector<8x128xf32>, vector<32x128xf32>, vector<8x32xf32> -> vector<8x32xf32>
    %25 = vector.extract_strided_slice %24 {offsets = [0, 0], sizes = [1, 32], strides = [1, 1]} : vector<8x32xf32> to vector<1x32xf32>
    %26 = vector.broadcast %21 : vector<1x1xf32> to vector<1x32xf32>
    %27 = arith.mulf %25, %26 : vector<1x32xf32>
    %28 = math.tanh %27 : vector<1x32xf32>
    %c0_16 = arith.constant 0 : index
    %c0_17 = arith.constant 0 : index
    %29 = vector.load %arg8[%c0_16, %c0_17] : memref<1x32xf32, #tpu.memory_space<vmem>>, vector<1x32xf32>
    tpu.vector_store %arg8[%c0_16, %c0_17], %28 {strides = array<i32>} : memref<1x32xf32, #tpu.memory_space<vmem>>, vector<1x32xf32>,
    return
  }
  func.func @transform_0(%arg0: i32) -> (i32, i32) {
    %c0_i32 = arith.constant 0 : i32
    %c0_i32_0 = arith.constant 0 : i32
    return %arg0, %c0_i32 : i32, i32
  }
  func.func @transform_1(%arg0: i32) -> (i32, i32) {
    %c0_i32 = arith.constant 0 : i32
    %c0_i32_0 = arith.constant 0 : i32
    %c0_i32_1 = arith.constant 0 : i32
    return %c0_i32, %c0_i32_0 : i32, i32
  }
  func.func @transform_2(%arg0: i32) -> (i32, i32) {
    %c0_i32 = arith.constant 0 : i32
    %c0_i32_0 = arith.constant 0 : i32
    return %arg0, %c0_i32 : i32, i32
  }
  func.func @transform_3(%arg0: i32) -> (i32, i32) {
    %c0_i32 = arith.constant 0 : i32
    %c0_i32_0 = arith.constant 0 : i32
    return %arg0, %c0_i32 : i32, i32
  }
  func.func @transform_4(%arg0: i32) -> (i32, i32) {
    %c0_i32 = arith.constant 0 : i32
    %c0_i32_0 = arith.constant 0 : i32
    %c0_i32_1 = arith.constant 0 : i32
    return %c0_i32, %c0_i32_0 : i32, i32
  }
  func.func @transform_5(%arg0: i32) -> (i32, i32) {
    %c0_i32 = arith.constant 0 : i32
    %c0_i32_0 = arith.constant 0 : i32
    %c0_i32_1 = arith.constant 0 : i32
    return %c0_i32, %c0_i32_0 : i32, i32
  }
  func.func @transform_6(%arg0: i32) -> (i32, i32) {
    %c0_i32 = arith.constant 0 : i32
    %c0_i32_0 = arith.constant 0 : i32
    return %arg0, %c0_i32 : i32, i32
  }
  func.func @transform_7(%arg0: i32) -> (i32, i32) {
    %c0_i32 = arith.constant 0 : i32
    %c0_i32_0 = arith.constant 0 : i32
    return %c0_i32, %arg0 : i32, i32
  }
}

module attributes {stable_mosaic.version = 11 : i64} {
  func.func @_xw_scale_kernel(%arg0: i32, %arg1: memref<26x128xf32, #tpu.memory_space<vmem>>, %arg2: memref<128x128xf32, #tpu.memory_space<vmem>>, %arg3: memref<26x1xf32, #tpu.memory_space<vmem>>, %arg4: memref<26x128xf32, #tpu.memory_space<vmem>>) attributes {dimension_semantics = [#tpu.dimension_semantics<parallel>], iteration_bounds = array<i64: 1>, scalar_prefetch = 0 : i64, scratch_operands = 0 : i64, tpu.core_type = #tpu.core_type<tc>, window_params = [{transform_indices = @transform_0, window_bounds = array<i64: 26, 128>}, {pipeline_mode = #tpu.pipeline_mode<synchronous>, transform_indices = @transform_1, window_bounds = array<i64: 128, 128>}, {transform_indices = @transform_2, window_bounds = array<i64: 26, 1>}, {transform_indices = @transform_3, window_bounds = array<i64: 26, 128>}]} {
    %c0 = arith.constant 0 : index
    %c0_0 = arith.constant 0 : index
    %0 = vector.load %arg1[%c0, %c0_0] : memref<26x128xf32, #tpu.memory_space<vmem>>, vector<26x128xf32>
    %c0_1 = arith.constant 0 : index
    %c0_2 = arith.constant 0 : index
    %1 = vector.load %arg2[%c0_1, %c0_2] : memref<128x128xf32, #tpu.memory_space<vmem>>, vector<128x128xf32>
    %cst = arith.constant dense<0.000000e+00> : vector<26x128xf32>
    %2 = tpu.matmul %0, %1, %cst {dimension_numbers = #tpu.dot_dimension_numbers<[1], [0], [0], [1], [0, 0, 1, 1], [], []>} : vector<26x128xf32>, vector<128x128xf32>, vector<26x128xf32> -> vector<26x128xf32>
    %c0_3 = arith.constant 0 : index
    %c0_4 = arith.constant 0 : index
    %3 = vector.load %arg3[%c0_3, %c0_4] : memref<26x1xf32, #tpu.memory_space<vmem>>, vector<26x1xf32>
    %4 = vector.broadcast %3 : vector<26x1xf32> to vector<26x128xf32>
    %5 = arith.mulf %4, %2 : vector<26x128xf32>
    %c0_5 = arith.constant 0 : index
    %c0_6 = arith.constant 0 : index
    %6 = vector.load %arg4[%c0_5, %c0_6] : memref<26x128xf32, #tpu.memory_space<vmem>>, vector<26x128xf32>
    tpu.vector_store %arg4[%c0_5, %c0_6], %5 {strides = array<i32>} : memref<26x128xf32, #tpu.memory_space<vmem>>, vector<26x128xf32>,
    return
  }
  func.func @transform_0(%arg0: i32) -> (i32, i32) {
    %c0_i32 = arith.constant 0 : i32
    %c0_i32_0 = arith.constant 0 : i32
    return %arg0, %c0_i32 : i32, i32
  }
  func.func @transform_1(%arg0: i32) -> (i32, i32) {
    %c0_i32 = arith.constant 0 : i32
    %c0_i32_0 = arith.constant 0 : i32
    %c0_i32_1 = arith.constant 0 : i32
    return %c0_i32, %c0_i32_0 : i32, i32
  }
  func.func @transform_2(%arg0: i32) -> (i32, i32) {
    %c0_i32 = arith.constant 0 : i32
    %c0_i32_0 = arith.constant 0 : i32
    return %arg0, %c0_i32 : i32, i32
  }
  func.func @transform_3(%arg0: i32) -> (i32, i32) {
    %c0_i32 = arith.constant 0 : i32
    %c0_i32_0 = arith.constant 0 : i32
    return %arg0, %c0_i32 : i32, i32
  }
}

module attributes {stable_mosaic.version = 11 : i64} {
  func.func @_agg_score_kernel(%arg0: i32, %arg1: memref<26x26xf32, #tpu.memory_space<vmem>>, %arg2: memref<26x128xf32, #tpu.memory_space<vmem>>, %arg3: memref<26x128xf32, #tpu.memory_space<vmem>>, %arg4: memref<26x1xf32, #tpu.memory_space<vmem>>, %arg5: memref<1x128xf32, #tpu.memory_space<vmem>>, %arg6: memref<1x128xf32, #tpu.memory_space<vmem>>, %arg7: memref<26x128xf32, #tpu.memory_space<vmem>>, %arg8: memref<1x26xf32, #tpu.memory_space<vmem>>) attributes {dimension_semantics = [#tpu.dimension_semantics<parallel>], iteration_bounds = array<i64: 1>, scalar_prefetch = 0 : i64, scratch_operands = 0 : i64, tpu.core_type = #tpu.core_type<tc>, window_params = [{transform_indices = @transform_0, window_bounds = array<i64: 26, 26>}, {pipeline_mode = #tpu.pipeline_mode<synchronous>, transform_indices = @transform_1, window_bounds = array<i64: 26, 128>}, {transform_indices = @transform_2, window_bounds = array<i64: 26, 128>}, {transform_indices = @transform_3, window_bounds = array<i64: 26, 1>}, {pipeline_mode = #tpu.pipeline_mode<synchronous>, transform_indices = @transform_4, window_bounds = array<i64: 1, 128>}, {pipeline_mode = #tpu.pipeline_mode<synchronous>, transform_indices = @transform_5, window_bounds = array<i64: 1, 128>}, {transform_indices = @transform_6, window_bounds = array<i64: 26, 128>}, {transform_indices = @transform_7, window_bounds = array<i64: 1, 26>}]} {
    %c0 = arith.constant 0 : index
    %c0_0 = arith.constant 0 : index
    %0 = vector.load %arg1[%c0, %c0_0] : memref<26x26xf32, #tpu.memory_space<vmem>>, vector<26x26xf32>
    %c0_1 = arith.constant 0 : index
    %c0_2 = arith.constant 0 : index
    %1 = vector.load %arg2[%c0_1, %c0_2] : memref<26x128xf32, #tpu.memory_space<vmem>>, vector<26x128xf32>
    %cst = arith.constant dense<0.000000e+00> : vector<26x128xf32>
    %2 = tpu.matmul %0, %1, %cst {dimension_numbers = #tpu.dot_dimension_numbers<[1], [0], [0], [1], [0, 0, 1, 1], [], []>} : vector<26x26xf32>, vector<26x128xf32>, vector<26x128xf32> -> vector<26x128xf32>
    %c0_3 = arith.constant 0 : index
    %c0_4 = arith.constant 0 : index
    %3 = vector.load %arg4[%c0_3, %c0_4] : memref<26x1xf32, #tpu.memory_space<vmem>>, vector<26x1xf32>
    %c0_5 = arith.constant 0 : index
    %c0_6 = arith.constant 0 : index
    %4 = vector.load %arg3[%c0_5, %c0_6] : memref<26x128xf32, #tpu.memory_space<vmem>>, vector<26x128xf32>
    %5 = arith.addf %2, %4 : vector<26x128xf32>
    %6 = vector.broadcast %3 : vector<26x1xf32> to vector<26x128xf32>
    %7 = arith.mulf %6, %5 : vector<26x128xf32>
    %c0_7 = arith.constant 0 : index
    %c0_8 = arith.constant 0 : index
    %8 = vector.load %arg5[%c0_7, %c0_8] : memref<1x128xf32, #tpu.memory_space<vmem>>, vector<1x128xf32>
    %9 = vector.broadcast %8 : vector<1x128xf32> to vector<26x128xf32>
    %10 = arith.addf %7, %9 : vector<26x128xf32>
    %cst_9 = arith.constant 0.000000e+00 : f32
    %11 = vector.broadcast %cst_9 : f32 to vector<26x128xf32>
    %12 = arith.maximumf %10, %11 : vector<26x128xf32>
    %c0_10 = arith.constant 0 : index
    %c0_11 = arith.constant 0 : index
    %13 = vector.load %arg7[%c0_10, %c0_11] : memref<26x128xf32, #tpu.memory_space<vmem>>, vector<26x128xf32>
    tpu.vector_store %arg7[%c0_10, %c0_11], %12 {strides = array<i32>} : memref<26x128xf32, #tpu.memory_space<vmem>>, vector<26x128xf32>,
    %c0_12 = arith.constant 0 : index
    %c0_13 = arith.constant 0 : index
    %14 = vector.load %arg6[%c0_12, %c0_13] : memref<1x128xf32, #tpu.memory_space<vmem>>, vector<1x128xf32>
    %15 = arith.mulf %14, %14 : vector<1x128xf32>
    %16 = vector.shape_cast %15 : vector<1x128xf32> to vector<1x1x128xf32>
    %cst_14 = arith.constant dense<0.000000e+00> : vector<1xf32>
    %17 = vector.multi_reduction <add>, %16, %cst_14 [1, 2] : vector<1x1x128xf32> to vector<1xf32>
    %18 = vector.shape_cast %17 : vector<1xf32> to vector<1x1x1xf32>
    %19 = vector.extract %18[0, 0, 0] : f32 from vector<1x1x1xf32>
    %20 = vector.broadcast %19 : f32 to vector<1x1xf32>
    %21 = math.rsqrt %20 : vector<1x1xf32>
    %22 = vector.shape_cast %14 : vector<1x128xf32> to vector<1x128xf32>
    %23 = vector.broadcast %22 : vector<1x128xf32> to vector<8x128xf32>
    %cst_15 = arith.constant dense<0.000000e+00> : vector<8x26xf32>
    %24 = tpu.matmul %23, %12, %cst_15 {dimension_numbers = #tpu.dot_dimension_numbers<[1], [1], [0], [0], [0, 0, 1, 0], [], []>} : vector<8x128xf32>, vector<26x128xf32>, vector<8x26xf32> -> vector<8x26xf32>
    %25 = vector.extract_strided_slice %24 {offsets = [0, 0], sizes = [1, 26], strides = [1, 1]} : vector<8x26xf32> to vector<1x26xf32>
    %26 = vector.broadcast %21 : vector<1x1xf32> to vector<1x26xf32>
    %27 = arith.mulf %25, %26 : vector<1x26xf32>
    %28 = math.tanh %27 : vector<1x26xf32>
    %c0_16 = arith.constant 0 : index
    %c0_17 = arith.constant 0 : index
    %29 = vector.load %arg8[%c0_16, %c0_17] : memref<1x26xf32, #tpu.memory_space<vmem>>, vector<1x26xf32>
    tpu.vector_store %arg8[%c0_16, %c0_17], %28 {strides = array<i32>} : memref<1x26xf32, #tpu.memory_space<vmem>>, vector<1x26xf32>,
    return
  }
  func.func @transform_0(%arg0: i32) -> (i32, i32) {
    %c0_i32 = arith.constant 0 : i32
    %c0_i32_0 = arith.constant 0 : i32
    return %arg0, %c0_i32 : i32, i32
  }
  func.func @transform_1(%arg0: i32) -> (i32, i32) {
    %c0_i32 = arith.constant 0 : i32
    %c0_i32_0 = arith.constant 0 : i32
    %c0_i32_1 = arith.constant 0 : i32
    return %c0_i32, %c0_i32_0 : i32, i32
  }
  func.func @transform_2(%arg0: i32) -> (i32, i32) {
    %c0_i32 = arith.constant 0 : i32
    %c0_i32_0 = arith.constant 0 : i32
    return %arg0, %c0_i32 : i32, i32
  }
  func.func @transform_3(%arg0: i32) -> (i32, i32) {
    %c0_i32 = arith.constant 0 : i32
    %c0_i32_0 = arith.constant 0 : i32
    return %arg0, %c0_i32 : i32, i32
  }
  func.func @transform_4(%arg0: i32) -> (i32, i32) {
    %c0_i32 = arith.constant 0 : i32
    %c0_i32_0 = arith.constant 0 : i32
    %c0_i32_1 = arith.constant 0 : i32
    return %c0_i32, %c0_i32_0 : i32, i32
  }
  func.func @transform_5(%arg0: i32) -> (i32, i32) {
    %c0_i32 = arith.constant 0 : i32
    %c0_i32_0 = arith.constant 0 : i32
    %c0_i32_1 = arith.constant 0 : i32
    return %c0_i32, %c0_i32_0 : i32, i32
  }
  func.func @transform_6(%arg0: i32) -> (i32, i32) {
    %c0_i32 = arith.constant 0 : i32
    %c0_i32_0 = arith.constant 0 : i32
    return %arg0, %c0_i32 : i32, i32
  }
  func.func @transform_7(%arg0: i32) -> (i32, i32) {
    %c0_i32 = arith.constant 0 : i32
    %c0_i32_0 = arith.constant 0 : i32
    return %c0_i32, %arg0 : i32, i32
  }
}

module attributes {stable_mosaic.version = 11 : i64} {
  func.func @_readout_kernel(%arg0: i32, %arg1: memref<2x11x128xf32, #tpu.memory_space<vmem>>, %arg2: memref<2x256xf32, #tpu.memory_space<vmem>>) attributes {dimension_semantics = [#tpu.dimension_semantics<parallel>], iteration_bounds = array<i64: 1>, scalar_prefetch = 0 : i64, scratch_operands = 0 : i64, tpu.core_type = #tpu.core_type<tc>, window_params = [{transform_indices = @transform_0, window_bounds = array<i64: 2, 11, 128>}, {transform_indices = @transform_1, window_bounds = array<i64: 2, 256>}]} {
    %c0 = arith.constant 0 : index
    %c0_0 = arith.constant 0 : index
    %c0_1 = arith.constant 0 : index
    %0 = vector.load %arg1[%c0, %c0_0, %c0_1] : memref<2x11x128xf32, #tpu.memory_space<vmem>>, vector<2x11x128xf32>
    %cst = arith.constant dense<0xFF800000> : vector<2x128xf32>
    %1 = vector.multi_reduction <maximumf>, %0, %cst [1] : vector<2x11x128xf32> to vector<2x128xf32>
    %c0_2 = arith.constant 0 : index
    %c0_3 = arith.constant 0 : index
    %2 = vector.load %arg2[%c0_2, %c0_3] : memref<2x256xf32, #tpu.memory_space<vmem>>, vector<2x128xf32>
    tpu.vector_store %arg2[%c0_2, %c0_3], %1 {strides = array<i32>} : memref<2x256xf32, #tpu.memory_space<vmem>>, vector<2x128xf32>,
    %cst_4 = arith.constant dense<0.000000e+00> : vector<2x128xf32>
    %3 = vector.multi_reduction <add>, %0, %cst_4 [1] : vector<2x11x128xf32> to vector<2x128xf32>
    %cst_5 = arith.constant 0.0909090936 : f32
    %4 = vector.broadcast %cst_5 : f32 to vector<2x128xf32>
    %5 = arith.mulf %3, %4 : vector<2x128xf32>
    %c0_6 = arith.constant 0 : index
    %c128 = arith.constant 128 : index
    %6 = vector.load %arg2[%c0_6, %c128] : memref<2x256xf32, #tpu.memory_space<vmem>>, vector<2x128xf32>
    tpu.vector_store %arg2[%c0_6, %c128], %5 {strides = array<i32>} : memref<2x256xf32, #tpu.memory_space<vmem>>, vector<2x128xf32>,
    return
  }
  func.func @transform_0(%arg0: i32) -> (i32, i32, i32) {
    %c0_i32 = arith.constant 0 : i32
    %c0_i32_0 = arith.constant 0 : i32
    %c0_i32_1 = arith.constant 0 : i32
    return %arg0, %c0_i32, %c0_i32_0 : i32, i32, i32
  }
  func.func @transform_1(%arg0: i32) -> (i32, i32) {
    %c0_i32 = arith.constant 0 : i32
    %c0_i32_0 = arith.constant 0 : i32
    return %arg0, %c0_i32 : i32, i32
  }
}

module attributes {stable_mosaic.version = 11 : i64} {
  func.func @_xw_scale_kernel(%arg0: i32, %arg1: memref<22x128xf32, #tpu.memory_space<vmem>>, %arg2: memref<128x128xf32, #tpu.memory_space<vmem>>, %arg3: memref<22x1xf32, #tpu.memory_space<vmem>>, %arg4: memref<22x128xf32, #tpu.memory_space<vmem>>) attributes {dimension_semantics = [#tpu.dimension_semantics<parallel>], iteration_bounds = array<i64: 1>, scalar_prefetch = 0 : i64, scratch_operands = 0 : i64, tpu.core_type = #tpu.core_type<tc>, window_params = [{transform_indices = @transform_0, window_bounds = array<i64: 22, 128>}, {pipeline_mode = #tpu.pipeline_mode<synchronous>, transform_indices = @transform_1, window_bounds = array<i64: 128, 128>}, {transform_indices = @transform_2, window_bounds = array<i64: 22, 1>}, {transform_indices = @transform_3, window_bounds = array<i64: 22, 128>}]} {
    %c0 = arith.constant 0 : index
    %c0_0 = arith.constant 0 : index
    %0 = vector.load %arg1[%c0, %c0_0] : memref<22x128xf32, #tpu.memory_space<vmem>>, vector<22x128xf32>
    %c0_1 = arith.constant 0 : index
    %c0_2 = arith.constant 0 : index
    %1 = vector.load %arg2[%c0_1, %c0_2] : memref<128x128xf32, #tpu.memory_space<vmem>>, vector<128x128xf32>
    %cst = arith.constant dense<0.000000e+00> : vector<22x128xf32>
    %2 = tpu.matmul %0, %1, %cst {dimension_numbers = #tpu.dot_dimension_numbers<[1], [0], [0], [1], [0, 0, 1, 1], [], []>} : vector<22x128xf32>, vector<128x128xf32>, vector<22x128xf32> -> vector<22x128xf32>
    %c0_3 = arith.constant 0 : index
    %c0_4 = arith.constant 0 : index
    %3 = vector.load %arg3[%c0_3, %c0_4] : memref<22x1xf32, #tpu.memory_space<vmem>>, vector<22x1xf32>
    %4 = vector.broadcast %3 : vector<22x1xf32> to vector<22x128xf32>
    %5 = arith.mulf %4, %2 : vector<22x128xf32>
    %c0_5 = arith.constant 0 : index
    %c0_6 = arith.constant 0 : index
    %6 = vector.load %arg4[%c0_5, %c0_6] : memref<22x128xf32, #tpu.memory_space<vmem>>, vector<22x128xf32>
    tpu.vector_store %arg4[%c0_5, %c0_6], %5 {strides = array<i32>} : memref<22x128xf32, #tpu.memory_space<vmem>>, vector<22x128xf32>,
    return
  }
  func.func @transform_0(%arg0: i32) -> (i32, i32) {
    %c0_i32 = arith.constant 0 : i32
    %c0_i32_0 = arith.constant 0 : i32
    return %arg0, %c0_i32 : i32, i32
  }
  func.func @transform_1(%arg0: i32) -> (i32, i32) {
    %c0_i32 = arith.constant 0 : i32
    %c0_i32_0 = arith.constant 0 : i32
    %c0_i32_1 = arith.constant 0 : i32
    return %c0_i32, %c0_i32_0 : i32, i32
  }
  func.func @transform_2(%arg0: i32) -> (i32, i32) {
    %c0_i32 = arith.constant 0 : i32
    %c0_i32_0 = arith.constant 0 : i32
    return %arg0, %c0_i32 : i32, i32
  }
  func.func @transform_3(%arg0: i32) -> (i32, i32) {
    %c0_i32 = arith.constant 0 : i32
    %c0_i32_0 = arith.constant 0 : i32
    return %arg0, %c0_i32 : i32, i32
  }
}

module attributes {stable_mosaic.version = 11 : i64} {
  func.func @_agg_score_kernel(%arg0: i32, %arg1: memref<22x22xf32, #tpu.memory_space<vmem>>, %arg2: memref<22x128xf32, #tpu.memory_space<vmem>>, %arg3: memref<22x128xf32, #tpu.memory_space<vmem>>, %arg4: memref<22x1xf32, #tpu.memory_space<vmem>>, %arg5: memref<1x128xf32, #tpu.memory_space<vmem>>, %arg6: memref<1x128xf32, #tpu.memory_space<vmem>>, %arg7: memref<22x128xf32, #tpu.memory_space<vmem>>, %arg8: memref<1x22xf32, #tpu.memory_space<vmem>>) attributes {dimension_semantics = [#tpu.dimension_semantics<parallel>], iteration_bounds = array<i64: 1>, scalar_prefetch = 0 : i64, scratch_operands = 0 : i64, tpu.core_type = #tpu.core_type<tc>, window_params = [{transform_indices = @transform_0, window_bounds = array<i64: 22, 22>}, {pipeline_mode = #tpu.pipeline_mode<synchronous>, transform_indices = @transform_1, window_bounds = array<i64: 22, 128>}, {transform_indices = @transform_2, window_bounds = array<i64: 22, 128>}, {transform_indices = @transform_3, window_bounds = array<i64: 22, 1>}, {pipeline_mode = #tpu.pipeline_mode<synchronous>, transform_indices = @transform_4, window_bounds = array<i64: 1, 128>}, {pipeline_mode = #tpu.pipeline_mode<synchronous>, transform_indices = @transform_5, window_bounds = array<i64: 1, 128>}, {transform_indices = @transform_6, window_bounds = array<i64: 22, 128>}, {transform_indices = @transform_7, window_bounds = array<i64: 1, 22>}]} {
    %c0 = arith.constant 0 : index
    %c0_0 = arith.constant 0 : index
    %0 = vector.load %arg1[%c0, %c0_0] : memref<22x22xf32, #tpu.memory_space<vmem>>, vector<22x22xf32>
    %c0_1 = arith.constant 0 : index
    %c0_2 = arith.constant 0 : index
    %1 = vector.load %arg2[%c0_1, %c0_2] : memref<22x128xf32, #tpu.memory_space<vmem>>, vector<22x128xf32>
    %cst = arith.constant dense<0.000000e+00> : vector<22x128xf32>
    %2 = tpu.matmul %0, %1, %cst {dimension_numbers = #tpu.dot_dimension_numbers<[1], [0], [0], [1], [0, 0, 1, 1], [], []>} : vector<22x22xf32>, vector<22x128xf32>, vector<22x128xf32> -> vector<22x128xf32>
    %c0_3 = arith.constant 0 : index
    %c0_4 = arith.constant 0 : index
    %3 = vector.load %arg4[%c0_3, %c0_4] : memref<22x1xf32, #tpu.memory_space<vmem>>, vector<22x1xf32>
    %c0_5 = arith.constant 0 : index
    %c0_6 = arith.constant 0 : index
    %4 = vector.load %arg3[%c0_5, %c0_6] : memref<22x128xf32, #tpu.memory_space<vmem>>, vector<22x128xf32>
    %5 = arith.addf %2, %4 : vector<22x128xf32>
    %6 = vector.broadcast %3 : vector<22x1xf32> to vector<22x128xf32>
    %7 = arith.mulf %6, %5 : vector<22x128xf32>
    %c0_7 = arith.constant 0 : index
    %c0_8 = arith.constant 0 : index
    %8 = vector.load %arg5[%c0_7, %c0_8] : memref<1x128xf32, #tpu.memory_space<vmem>>, vector<1x128xf32>
    %9 = vector.broadcast %8 : vector<1x128xf32> to vector<22x128xf32>
    %10 = arith.addf %7, %9 : vector<22x128xf32>
    %cst_9 = arith.constant 0.000000e+00 : f32
    %11 = vector.broadcast %cst_9 : f32 to vector<22x128xf32>
    %12 = arith.maximumf %10, %11 : vector<22x128xf32>
    %c0_10 = arith.constant 0 : index
    %c0_11 = arith.constant 0 : index
    %13 = vector.load %arg7[%c0_10, %c0_11] : memref<22x128xf32, #tpu.memory_space<vmem>>, vector<22x128xf32>
    tpu.vector_store %arg7[%c0_10, %c0_11], %12 {strides = array<i32>} : memref<22x128xf32, #tpu.memory_space<vmem>>, vector<22x128xf32>,
    %c0_12 = arith.constant 0 : index
    %c0_13 = arith.constant 0 : index
    %14 = vector.load %arg6[%c0_12, %c0_13] : memref<1x128xf32, #tpu.memory_space<vmem>>, vector<1x128xf32>
    %15 = arith.mulf %14, %14 : vector<1x128xf32>
    %16 = vector.shape_cast %15 : vector<1x128xf32> to vector<1x1x128xf32>
    %cst_14 = arith.constant dense<0.000000e+00> : vector<1xf32>
    %17 = vector.multi_reduction <add>, %16, %cst_14 [1, 2] : vector<1x1x128xf32> to vector<1xf32>
    %18 = vector.shape_cast %17 : vector<1xf32> to vector<1x1x1xf32>
    %19 = vector.extract %18[0, 0, 0] : f32 from vector<1x1x1xf32>
    %20 = vector.broadcast %19 : f32 to vector<1x1xf32>
    %21 = math.rsqrt %20 : vector<1x1xf32>
    %22 = vector.shape_cast %14 : vector<1x128xf32> to vector<1x128xf32>
    %23 = vector.broadcast %22 : vector<1x128xf32> to vector<8x128xf32>
    %cst_15 = arith.constant dense<0.000000e+00> : vector<8x22xf32>
    %24 = tpu.matmul %23, %12, %cst_15 {dimension_numbers = #tpu.dot_dimension_numbers<[1], [1], [0], [0], [0, 0, 1, 0], [], []>} : vector<8x128xf32>, vector<22x128xf32>, vector<8x22xf32> -> vector<8x22xf32>
    %25 = vector.extract_strided_slice %24 {offsets = [0, 0], sizes = [1, 22], strides = [1, 1]} : vector<8x22xf32> to vector<1x22xf32>
    %26 = vector.broadcast %21 : vector<1x1xf32> to vector<1x22xf32>
    %27 = arith.mulf %25, %26 : vector<1x22xf32>
    %28 = math.tanh %27 : vector<1x22xf32>
    %c0_16 = arith.constant 0 : index
    %c0_17 = arith.constant 0 : index
    %29 = vector.load %arg8[%c0_16, %c0_17] : memref<1x22xf32, #tpu.memory_space<vmem>>, vector<1x22xf32>
    tpu.vector_store %arg8[%c0_16, %c0_17], %28 {strides = array<i32>} : memref<1x22xf32, #tpu.memory_space<vmem>>, vector<1x22xf32>,
    return
  }
  func.func @transform_0(%arg0: i32) -> (i32, i32) {
    %c0_i32 = arith.constant 0 : i32
    %c0_i32_0 = arith.constant 0 : i32
    return %arg0, %c0_i32 : i32, i32
  }
  func.func @transform_1(%arg0: i32) -> (i32, i32) {
    %c0_i32 = arith.constant 0 : i32
    %c0_i32_0 = arith.constant 0 : i32
    %c0_i32_1 = arith.constant 0 : i32
    return %c0_i32, %c0_i32_0 : i32, i32
  }
  func.func @transform_2(%arg0: i32) -> (i32, i32) {
    %c0_i32 = arith.constant 0 : i32
    %c0_i32_0 = arith.constant 0 : i32
    return %arg0, %c0_i32 : i32, i32
  }
  func.func @transform_3(%arg0: i32) -> (i32, i32) {
    %c0_i32 = arith.constant 0 : i32
    %c0_i32_0 = arith.constant 0 : i32
    return %arg0, %c0_i32 : i32, i32
  }
  func.func @transform_4(%arg0: i32) -> (i32, i32) {
    %c0_i32 = arith.constant 0 : i32
    %c0_i32_0 = arith.constant 0 : i32
    %c0_i32_1 = arith.constant 0 : i32
    return %c0_i32, %c0_i32_0 : i32, i32
  }
  func.func @transform_5(%arg0: i32) -> (i32, i32) {
    %c0_i32 = arith.constant 0 : i32
    %c0_i32_0 = arith.constant 0 : i32
    %c0_i32_1 = arith.constant 0 : i32
    return %c0_i32, %c0_i32_0 : i32, i32
  }
  func.func @transform_6(%arg0: i32) -> (i32, i32) {
    %c0_i32 = arith.constant 0 : i32
    %c0_i32_0 = arith.constant 0 : i32
    return %arg0, %c0_i32 : i32, i32
  }
  func.func @transform_7(%arg0: i32) -> (i32, i32) {
    %c0_i32 = arith.constant 0 : i32
    %c0_i32_0 = arith.constant 0 : i32
    return %c0_i32, %arg0 : i32, i32
  }
}

module attributes {stable_mosaic.version = 11 : i64} {
  func.func @_readout_kernel(%arg0: i32, %arg1: memref<2x9x128xf32, #tpu.memory_space<vmem>>, %arg2: memref<2x256xf32, #tpu.memory_space<vmem>>) attributes {dimension_semantics = [#tpu.dimension_semantics<parallel>], iteration_bounds = array<i64: 1>, scalar_prefetch = 0 : i64, scratch_operands = 0 : i64, tpu.core_type = #tpu.core_type<tc>, window_params = [{transform_indices = @transform_0, window_bounds = array<i64: 2, 9, 128>}, {transform_indices = @transform_1, window_bounds = array<i64: 2, 256>}]} {
    %c0 = arith.constant 0 : index
    %c0_0 = arith.constant 0 : index
    %c0_1 = arith.constant 0 : index
    %0 = vector.load %arg1[%c0, %c0_0, %c0_1] : memref<2x9x128xf32, #tpu.memory_space<vmem>>, vector<2x9x128xf32>
    %cst = arith.constant dense<0xFF800000> : vector<2x128xf32>
    %1 = vector.multi_reduction <maximumf>, %0, %cst [1] : vector<2x9x128xf32> to vector<2x128xf32>
    %c0_2 = arith.constant 0 : index
    %c0_3 = arith.constant 0 : index
    %2 = vector.load %arg2[%c0_2, %c0_3] : memref<2x256xf32, #tpu.memory_space<vmem>>, vector<2x128xf32>
    tpu.vector_store %arg2[%c0_2, %c0_3], %1 {strides = array<i32>} : memref<2x256xf32, #tpu.memory_space<vmem>>, vector<2x128xf32>,
    %cst_4 = arith.constant dense<0.000000e+00> : vector<2x128xf32>
    %3 = vector.multi_reduction <add>, %0, %cst_4 [1] : vector<2x9x128xf32> to vector<2x128xf32>
    %cst_5 = arith.constant 0.111111112 : f32
    %4 = vector.broadcast %cst_5 : f32 to vector<2x128xf32>
    %5 = arith.mulf %3, %4 : vector<2x128xf32>
    %c0_6 = arith.constant 0 : index
    %c128 = arith.constant 128 : index
    %6 = vector.load %arg2[%c0_6, %c128] : memref<2x256xf32, #tpu.memory_space<vmem>>, vector<2x128xf32>
    tpu.vector_store %arg2[%c0_6, %c128], %5 {strides = array<i32>} : memref<2x256xf32, #tpu.memory_space<vmem>>, vector<2x128xf32>,
    return
  }
  func.func @transform_0(%arg0: i32) -> (i32, i32, i32) {
    %c0_i32 = arith.constant 0 : i32
    %c0_i32_0 = arith.constant 0 : i32
    %c0_i32_1 = arith.constant 0 : i32
    return %arg0, %c0_i32, %c0_i32_0 : i32, i32, i32
  }
  func.func @transform_1(%arg0: i32) -> (i32, i32) {
    %c0_i32 = arith.constant 0 : i32
    %c0_i32_0 = arith.constant 0 : i32
    return %arg0, %c0_i32 : i32, i32
  }
}

module attributes {stable_mosaic.version = 11 : i64} {
  func.func @_readout_kernel(%arg0: i32, %arg1: memref<2x13x128xf32, #tpu.memory_space<vmem>>, %arg2: memref<2x256xf32, #tpu.memory_space<vmem>>) attributes {dimension_semantics = [#tpu.dimension_semantics<parallel>], iteration_bounds = array<i64: 1>, scalar_prefetch = 0 : i64, scratch_operands = 0 : i64, tpu.core_type = #tpu.core_type<tc>, window_params = [{transform_indices = @transform_0, window_bounds = array<i64: 2, 13, 128>}, {transform_indices = @transform_1, window_bounds = array<i64: 2, 256>}]} {
    %c0 = arith.constant 0 : index
    %c0_0 = arith.constant 0 : index
    %c0_1 = arith.constant 0 : index
    %0 = vector.load %arg1[%c0, %c0_0, %c0_1] : memref<2x13x128xf32, #tpu.memory_space<vmem>>, vector<2x13x128xf32>
    %cst = arith.constant dense<0xFF800000> : vector<2x128xf32>
    %1 = vector.multi_reduction <maximumf>, %0, %cst [1] : vector<2x13x128xf32> to vector<2x128xf32>
    %c0_2 = arith.constant 0 : index
    %c0_3 = arith.constant 0 : index
    %2 = vector.load %arg2[%c0_2, %c0_3] : memref<2x256xf32, #tpu.memory_space<vmem>>, vector<2x128xf32>
    tpu.vector_store %arg2[%c0_2, %c0_3], %1 {strides = array<i32>} : memref<2x256xf32, #tpu.memory_space<vmem>>, vector<2x128xf32>,
    %cst_4 = arith.constant dense<0.000000e+00> : vector<2x128xf32>
    %3 = vector.multi_reduction <add>, %0, %cst_4 [1] : vector<2x13x128xf32> to vector<2x128xf32>
    %cst_5 = arith.constant 0.0769230798 : f32
    %4 = vector.broadcast %cst_5 : f32 to vector<2x128xf32>
    %5 = arith.mulf %3, %4 : vector<2x128xf32>
    %c0_6 = arith.constant 0 : index
    %c128 = arith.constant 128 : index
    %6 = vector.load %arg2[%c0_6, %c128] : memref<2x256xf32, #tpu.memory_space<vmem>>, vector<2x128xf32>
    tpu.vector_store %arg2[%c0_6, %c128], %5 {strides = array<i32>} : memref<2x256xf32, #tpu.memory_space<vmem>>, vector<2x128xf32>,
    return
  }
  func.func @transform_0(%arg0: i32) -> (i32, i32, i32) {
    %c0_i32 = arith.constant 0 : i32
    %c0_i32_0 = arith.constant 0 : i32
    %c0_i32_1 = arith.constant 0 : i32
    return %arg0, %c0_i32, %c0_i32_0 : i32, i32, i32
  }
  func.func @transform_1(%arg0: i32) -> (i32, i32) {
    %c0_i32 = arith.constant 0 : i32
    %c0_i32_0 = arith.constant 0 : i32
    return %arg0, %c0_i32 : i32, i32
  }
}

module attributes {stable_mosaic.version = 11 : i64} {
  func.func @_mlp_kernel(%arg0: memref<2x256xf32, #tpu.memory_space<vmem>>, %arg1: memref<256x128xf32, #tpu.memory_space<vmem>>, %arg2: memref<1x128xf32, #tpu.memory_space<vmem>>, %arg3: memref<128x64xf32, #tpu.memory_space<vmem>>, %arg4: memref<1x64xf32, #tpu.memory_space<vmem>>, %arg5: memref<1x64xf32, #tpu.memory_space<vmem>>, %arg6: memref<1x1xf32, #tpu.memory_space<vmem>>, %arg7: memref<2x1xf32, #tpu.memory_space<vmem>>) attributes {dimension_semantics = [], scalar_prefetch = 0 : i64, scratch_operands = 0 : i64, tpu.core_type = #tpu.core_type<tc>} {
    %c0 = arith.constant 0 : index
    %c0_0 = arith.constant 0 : index
    %0 = vector.load %arg0[%c0, %c0_0] : memref<2x256xf32, #tpu.memory_space<vmem>>, vector<2x256xf32>
    %c0_1 = arith.constant 0 : index
    %c0_2 = arith.constant 0 : index
    %1 = vector.load %arg1[%c0_1, %c0_2] : memref<256x128xf32, #tpu.memory_space<vmem>>, vector<256x128xf32>
    %cst = arith.constant dense<0.000000e+00> : vector<2x128xf32>
    %2 = tpu.matmul %0, %1, %cst {dimension_numbers = #tpu.dot_dimension_numbers<[1], [0], [0], [1], [0, 0, 1, 1], [], []>} : vector<2x256xf32>, vector<256x128xf32>, vector<2x128xf32> -> vector<2x128xf32>
    %c0_3 = arith.constant 0 : index
    %c0_4 = arith.constant 0 : index
    %3 = vector.load %arg2[%c0_3, %c0_4] : memref<1x128xf32, #tpu.memory_space<vmem>>, vector<1x128xf32>
    %4 = vector.broadcast %3 : vector<1x128xf32> to vector<2x128xf32>
    %5 = arith.addf %2, %4 : vector<2x128xf32>
    %cst_5 = arith.constant 0.000000e+00 : f32
    %6 = vector.broadcast %cst_5 : f32 to vector<2x128xf32>
    %7 = arith.maximumf %5, %6 : vector<2x128xf32>
    %c0_6 = arith.constant 0 : index
    %c0_7 = arith.constant 0 : index
    %8 = vector.load %arg3[%c0_6, %c0_7] : memref<128x64xf32, #tpu.memory_space<vmem>>, vector<128x64xf32>
    %cst_8 = arith.constant dense<0.000000e+00> : vector<2x64xf32>
    %9 = tpu.matmul %7, %8, %cst_8 {dimension_numbers = #tpu.dot_dimension_numbers<[1], [0], [0], [1], [0, 0, 1, 1], [], []>} : vector<2x128xf32>, vector<128x64xf32>, vector<2x64xf32> -> vector<2x64xf32>
    %c0_9 = arith.constant 0 : index
    %c0_10 = arith.constant 0 : index
    %10 = vector.load %arg4[%c0_9, %c0_10] : memref<1x64xf32, #tpu.memory_space<vmem>>, vector<1x64xf32>
    %11 = vector.broadcast %10 : vector<1x64xf32> to vector<2x64xf32>
    %12 = arith.addf %9, %11 : vector<2x64xf32>
    %cst_11 = arith.constant 0.000000e+00 : f32
    %13 = vector.broadcast %cst_11 : f32 to vector<2x64xf32>
    %14 = arith.maximumf %12, %13 : vector<2x64xf32>
    %c0_12 = arith.constant 0 : index
    %c0_13 = arith.constant 0 : index
    %15 = vector.load %arg5[%c0_12, %c0_13] : memref<1x64xf32, #tpu.memory_space<vmem>>, vector<1x64xf32>
    %16 = vector.broadcast %15 : vector<1x64xf32> to vector<2x64xf32>
    %17 = arith.mulf %14, %16 : vector<2x64xf32>
    %cst_14 = arith.constant dense<0.000000e+00> : vector<2xf32>
    %18 = vector.multi_reduction <add>, %17, %cst_14 [1] : vector<2x64xf32> to vector<2xf32>
    %19 = vector.shape_cast %18 : vector<2xf32> to vector<2x1xf32>
    %c0_15 = arith.constant 0 : index
    %c0_16 = arith.constant 0 : index
    %20 = vector.load %arg6[%c0_15, %c0_16] : memref<1x1xf32, #tpu.memory_space<vmem>>, vector<1x1xf32>
    %21 = vector.broadcast %20 : vector<1x1xf32> to vector<2x1xf32>
    %22 = arith.addf %19, %21 : vector<2x1xf32>
    %c0_17 = arith.constant 0 : index
    %c0_18 = arith.constant 0 : index
    %23 = vector.load %arg7[%c0_17, %c0_18] : memref<2x1xf32, #tpu.memory_space<vmem>>, vector<2x1xf32>
    tpu.vector_store %arg7[%c0_17, %c0_18], %22 {strides = array<i32>} : memref<2x1xf32, #tpu.memory_space<vmem>>, vector<2x1xf32>,
    return
  }
}

</mosaic_0001>

<llo_original>
// kernel: net_forward.10
$region0: #{net_forward.10}
  #allocation0 [shape = 'u32[]', space=smem, size = 0x4, offset = 0x4, fixed_abs, tag = 'smem constant byte address 0x4 - core index']
  #allocation1 [shape = 'u32[144,128]{1,0:T(1,128)}', space=vmem, size = 0x12000, scoped, tag = 'internal scratch']
  %s0 = inlined_call_operand.vmem [shape: f32[32,1], index: 0, kind: input, shape index: {}]
  %s1 = inlined_call_operand.vmem [shape: f32[1,128], index: 1, kind: input, shape index: {}]
  %s2 = inlined_call_operand.vmem [shape: f32[32,1], index: 2, kind: input, shape index: {}]
  %s3 = inlined_call_operand.vmem [shape: f32[32,128], index: 3, kind: output, shape index: {}]
  %s4 = sld [smem:[#allocation0]]
  $region22: #{net_forward.10} parent=0
    _
  %s6 = ssub.s32 1, %s4
  %s7 = scalar_select 0, %s6, %s4
  // Predicated region
  $region2: #{net_forward.10} parent=0 // pred_check
    _
  $region3: #{net_forward.10} parent=0 // pred_check_branch
    %9 = sbr.rel (0) target = $region5
  $region4: #{net_forward.10} parent=0 // pred_region
    _
  $region5: #{net_forward.10} parent=0 // pred_fallthru
    _
  // Predicated region
  $region6: #{net_forward.10} parent=0 // pred_check
    _
  $region7: #{net_forward.10} parent=0 // pred_check_branch
    %11 = sbr.rel (0) target = $region9
  $region8: #{net_forward.10} parent=0 // pred_region
    _
  $region9: #{net_forward.10} parent=0 // pred_fallthru
    _
  // Predicated region
  $region10: #{net_forward.10} parent=0 // pred_check
    _
  $region11: #{net_forward.10} parent=0 // pred_check_branch
    %13 = sbr.rel (0) target = $region13
  $region12: #{net_forward.10} parent=0 // pred_region
    _
  $region13: #{net_forward.10} parent=0 // pred_fallthru
    _
  %v14 = vld [vmem:[%s0] sm:$0xff]
  %v15 = vld [vmem:[%s0 + $0x8] sm:$0xff]
  %v16 = vld [vmem:[%s0 + $0x10] sm:$0xff]
  %v17 = vld [vmem:[%s0 + $0x18] sm:$0xff]
  %v18 = vld [vmem:[%s1] sm:$0x1]
  %20 = vset.pattern.permute.xlu0 0
  %21 = vperm.xlu0 %20, %v14
  %v22 = vpop.permute.xlu0 %21
  %25 = vset.pattern.permute.xlu0 0
  %26 = vperm.xlu0 %25, %v15
  %v27 = vpop.permute.xlu0 %26
  %30 = vset.pattern.permute.xlu0 0
  %31 = vperm.xlu0 %30, %v16
  %v32 = vpop.permute.xlu0 %31
  %35 = vset.pattern.permute.xlu0 0
  %36 = vperm.xlu0 %35, %v17
  %v37 = vpop.permute.xlu0 %36
  %v40 = vlaneseq
  %v41 = vshrl.u32 %v40, 7
  %v42 = vsub.s32 0, %v41
  %v43 = vrot.slane %v18, %v42
  %v45 = vmul.f32 %v22, %v43
  %v46 = vmul.f32 %v27, %v43
  %v47 = vmul.f32 %v32, %v43
  %v48 = vmul.f32 %v37, %v43
  %v49 = vld [vmem:[%s2] sm:$0xff]
  %v50 = vld [vmem:[%s2 + $0x8] sm:$0xff]
  %v51 = vld [vmem:[%s2 + $0x10] sm:$0xff]
  %v52 = vld [vmem:[%s2 + $0x18] sm:$0xff]
  %54 = vset.pattern.permute.xlu0 0
  %55 = vperm.xlu0 %54, %v49
  %v56 = vpop.permute.xlu0 %55
  %59 = vset.pattern.permute.xlu0 0
  %60 = vperm.xlu0 %59, %v50
  %v61 = vpop.permute.xlu0 %60
  %64 = vset.pattern.permute.xlu0 0
  %65 = vperm.xlu0 %64, %v51
  %v66 = vpop.permute.xlu0 %65
  %69 = vset.pattern.permute.xlu0 0
  %70 = vperm.xlu0 %69, %v52
  %v71 = vpop.permute.xlu0 %70
  %v73 = vmul.f32 %v56, %v45
  %v74 = vmul.f32 %v61, %v46
  %v75 = vmul.f32 %v66, %v47
  %v76 = vmul.f32 %v71, %v48
  %77 = vst [vmem:[%s3] sm:$0xff] %v73
  %78 = vst [vmem:[%s3 + $0x8] sm:$0xff] %v74
  %79 = vst [vmem:[%s3 + $0x10] sm:$0xff] %v75
  %80 = vst [vmem:[%s3 + $0x18] sm:$0xff] %v76
  // Predicated region
  $region14: #{net_forward.10} parent=0 // pred_check
    _
  $region15: #{net_forward.10} parent=0 // pred_check_branch
    %82 = sbr.rel (0) target = $region17
  $region16: #{net_forward.10} parent=0 // pred_region
    _
  $region17: #{net_forward.10} parent=0 // pred_fallthru
    _
  // Predicated region
  $region18: #{net_forward.10} parent=0 // pred_check
    _
  $region19: #{net_forward.10} parent=0 // pred_check_branch
    %84 = sbr.rel (0) target = $region21
  $region20: #{net_forward.10} parent=0 // pred_region
    _
  $region21: #{net_forward.10} parent=0 // pred_fallthru
    _

// kernel: mul.17
$region0: #{mul.17}
  %s0 = inlined_call_operand.vmem [shape: f32[2,13], index: 0, kind: input, shape index: {}]
  %s1 = inlined_call_operand.vmem [shape: f32[26], index: 1, kind: output, shape index: {}]
  $region1: #{mul.17} parent=0
    #allocation0 [shape = 'u8[4096]{0}', space=vmem, size = 0x1000, scoped, tag = 'scoped mem for output reshape']
    #allocation1 [shape = 'u8[4096]{0}', space=vmem, size = 0x1000, scoped, tag = 'scoped mem for input reshape']
    %s3 = sshllo.u32 0, 2
    %v4 = vld [vmem:[%s0] sm:%s3]
    %5 = vst [vmem:[#allocation1] sm:%s3] %v4
    %v6 = vld [vmem:[#allocation1] sm:$0x1]
    %vm7 = vcmask 105472
    %8 = vst.msk [vmem:[#allocation0] sm:$0x1] %vm7, %v6
    %s9 = scalar_lea.vmem [#allocation1], 1
    %v10 = vld [vmem:[%s9] sm:$0x1]
    %11 = vrot.lane.b32.xlu0 %v10, 13
    %v12 = vpop.permute.xlu0 %11
    %vm13 = vcmask 212072
    %14 = vst.msk [vmem:[#allocation0] sm:$0x1] %vm13, %v12
    %s16 = sshllo.u32 0, 1
    %v18 = vld [vmem:[#allocation0] sm:%s16]
    %s19 = sshllo.u32 0, 1
    %20 = vst [vmem:[%s1] sm:%s19] %v18

// kernel: net_forward.11
$region0: #{net_forward.11}
  #allocation0 [shape = 'u32[]', space=smem, size = 0x4, offset = 0x4, fixed_abs, tag = 'smem constant byte address 0x4 - core index']
  #allocation1 [shape = 'u32[144,128]{1,0:T(1,128)}', space=vmem, size = 0x12000, scoped, tag = 'internal scratch']
  %s0 = inlined_call_operand.vmem [shape: f32[32,32], index: 0, kind: input, shape index: {}]
  %s1 = inlined_call_operand.vmem [shape: f32[32,128], index: 1, kind: input, shape index: {}, may-alias: {1,2}]
  %s2 = inlined_call_operand.vmem [shape: f32[32,128], index: 2, kind: input, shape index: {}, may-alias: {1,2}]
  %s3 = inlined_call_operand.vmem [shape: f32[32,1], index: 3, kind: input, shape index: {}]
  %s4 = inlined_call_operand.vmem [shape: f32[1,128], index: 4, kind: input, shape index: {}]
  %s5 = inlined_call_operand.vmem [shape: f32[1,128], index: 5, kind: input, shape index: {}]
  %s6 = inlined_call_operand.vmem [shape: f32[32,128], index: 6, kind: output, shape index: {0}]
  %s7 = inlined_call_operand.vmem [shape: f32[1,32], index: 7, kind: output, shape index: {1}]
  %8 = xla_tuple %s6, %s7
  %s9 = sld [smem:[#allocation0]]
  $region42: #{net_forward.11} parent=0
    _
  %s11 = ssub.s32 1, %s9
  %s12 = scalar_select 0, %s11, %s9
  // Predicated region
  $region2: #{net_forward.11} parent=0 // pred_check
    _
  $region3: #{net_forward.11} parent=0 // pred_check_branch
    %14 = sbr.rel (0) target = $region5
  $region4: #{net_forward.11} parent=0 // pred_region
    _
  $region5: #{net_forward.11} parent=0 // pred_fallthru
    _
  // Predicated region
  $region6: #{net_forward.11} parent=0 // pred_check
    _
  $region7: #{net_forward.11} parent=0 // pred_check_branch
    %16 = sbr.rel (0) target = $region9
  $region8: #{net_forward.11} parent=0 // pred_region
    _
  $region9: #{net_forward.11} parent=0 // pred_fallthru
    _
  // Predicated region
  $region10: #{net_forward.11} parent=0 // pred_check
    _
  $region11: #{net_forward.11} parent=0 // pred_check_branch
    %18 = sbr.rel (0) target = $region13
  $region12: #{net_forward.11} parent=0 // pred_region
    _
  $region13: #{net_forward.11} parent=0 // pred_fallthru
    _
  // Predicated region
  $region14: #{net_forward.11} parent=0 // pred_check
    _
  $region15: #{net_forward.11} parent=0 // pred_check_branch
    %20 = sbr.rel (0) target = $region17
  $region16: #{net_forward.11} parent=0 // pred_region
    _
  $region17: #{net_forward.11} parent=0 // pred_fallthru
    _
  // Predicated region
  $region18: #{net_forward.11} parent=0 // pred_check
    _
  $region19: #{net_forward.11} parent=0 // pred_check_branch
    %22 = sbr.rel (0) target = $region21
  $region20: #{net_forward.11} parent=0 // pred_region
    _
  $region21: #{net_forward.11} parent=0 // pred_fallthru
    _
  // Predicated region
  $region22: #{net_forward.11} parent=0 // pred_check
    _
  $region23: #{net_forward.11} parent=0 // pred_check_branch
    %24 = sbr.rel (0) target = $region25
  $region24: #{net_forward.11} parent=0 // pred_region
    _
  $region25: #{net_forward.11} parent=0 // pred_fallthru
    _
  %v25 = vld [vmem:[%s0] sm:$0xff]
  %v26 = vld [vmem:[%s0 + $0x8] sm:$0xff]
  %v27 = vld [vmem:[%s0 + $0x10] sm:$0xff]
  %v28 = vld [vmem:[%s0 + $0x18] sm:$0xff]
  %v29 = vld [vmem:[%s1] sm:$0xff]
  %v30 = vld [vmem:[%s1 + $0x8] sm:$0xff]
  %v31 = vld [vmem:[%s1 + $0x10] sm:$0xff]
  %v32 = vld [vmem:[%s1 + $0x18] sm:$0xff]
  %v33 = vld [vmem:[%s3] sm:$0xff]
  %v34 = vld [vmem:[%s3 + $0x8] sm:$0xff]
  %v35 = vld [vmem:[%s3 + $0x10] sm:$0xff]
  %v36 = vld [vmem:[%s3 + $0x18] sm:$0xff]
  %v37 = vld [vmem:[%s2] sm:$0xff]
  %v38 = vld [vmem:[%s2 + $0x8] sm:$0xff]
  %v39 = vld [vmem:[%s2 + $0x10] sm:$0xff]
  %v40 = vld [vmem:[%s2 + $0x18] sm:$0xff]
  %vm41 = vcmask 261120
  %v43 = vsel %vm41, %v25, 0
  %v46 = vsel %vm41, %v26, 0
  %v49 = vsel %vm41, %v27, 0
  %v52 = vsel %vm41, %v28, 0
  %54 = vmatprep.subr.mxu0 0.0
  %55 = vmatpush1.msra.mxu0 %v29
  %56 = vmatprep.subr.mxu0 0.0
  %57 = vmatpush1.msra.mxu0 %v30
  %58 = vmatprep.subr.mxu0 0.0
  %59 = vmatpush1.msra.mxu0 %v31
  %60 = vmatprep.subr.mxu0 0.0
  %61 = vmatpush1.msra.mxu0 %v32
  %62 = vmatprep.subr.mxu0 0.0
  %63 = vmatpush1.msra.mxu0 0.0
  %64 = vmatprep.subr.mxu0 0.0
  %65 = vmatpush1.msra.mxu0 0.0
  %66 = vmatprep.subr.mxu0 0.0
  %67 = vmatpush1.msra.mxu0 0.0
  %68 = vmatprep.subr.mxu0 0.0
  %69 = vmatpush1.msra.mxu0 0.0
  %70 = vmatprep.subr.mxu0 0.0
  %71 = vmatpush1.msra.mxu0 0.0
  %72 = vmatprep.subr.mxu0 0.0
  %73 = vmatpush1.msra.mxu0 0.0
  %74 = vmatprep.subr.mxu0 0.0
  %75 = vmatpush1.msra.mxu0 0.0
  %76 = vmatprep.subr.mxu0 0.0
  %77 = vmatpush1.msra.mxu0 0.0
  %78 = vmatprep.subr.mxu0 0.0
  %79 = vmatpush1.msra.mxu0 0.0
  %80 = vmatprep.subr.mxu0 0.0
  %81 = vmatpush1.msra.mxu0 0.0
  %82 = vmatprep.subr.mxu0 0.0
  %83 = vmatpush1.msra.mxu0 0.0
  %84 = vmatprep.subr.mxu0 0.0
  %85 = vmatpush1.msra.mxu0 0.0
  %86 = vmatprep.subr.mxu0 0.0
  %87 = vmatpush1.msra.mxu0 0.0
  %88 = vmatprep.subr.mxu0 0.0
  %89 = vmatpush1.msra.mxu0 0.0
  %90 = vmatprep.subr.mxu0 0.0
  %91 = vmatpush1.msra.mxu0 0.0
  %92 = vmatprep.subr.mxu0 0.0
  %93 = vmatpush1.msra.mxu0 0.0
  %94 = vmatprep.subr.mxu0 0.0
  %95 = vmatpush1.msra.mxu0 0.0
  %96 = vmatprep.subr.mxu0 0.0
  %97 = vmatpush1.msra.mxu0 0.0
  %98 = vmatprep.subr.mxu0 0.0
  %99 = vmatpush1.msra.mxu0 0.0
  %100 = vmatprep.subr.mxu0 0.0
  %101 = vmatpush1.msra.mxu0 0.0
  %102 = vmatprep.subr.mxu0 0.0
  %103 = vmatpush1.msra.mxu0 0.0
  %104 = vmatprep.subr.mxu0 0.0
  %105 = vmatpush1.msra.mxu0 0.0
  %106 = vmatprep.subr.mxu0 0.0
  %107 = vmatpush1.msra.mxu0 0.0
  %108 = vmatprep.subr.mxu0 0.0
  %109 = vmatpush1.msra.mxu0 0.0
  %110 = vmatprep.subr.mxu0 0.0
  %111 = vmatpush1.msra.mxu0 0.0
  %112 = vmatprep.subr.mxu0 0.0
  %113 = vmatpush1.msra.mxu0 0.0
  %114 = vmatprep.subr.mxu0 0.0
  %115 = vmatpush1.msra.mxu0 0.0
  %116 = vmatprep.subr.mxu0 0.0
  %117 = vmatpush1.msra.mxu0 0.0
  %118 = vmatprep.mubr.f32.mxu0 0.0
  %119 = vmatmul.mubr.f32.gmra.mrb[0].mxu0 %v43
  %v120 = vpop.f32.mrb[0].mxu0
  %v121 = vadd.f32 %v37, %v120
  %v122 = vpop.f32.mrb[0].mxu0
  %123 = vmatprep.mubr.f32.mxu0 0.0
  %124 = vmatmul.mubr.f32.gmra.mrb[0].mxu0 %v46
  %v125 = vpop.f32.mrb[0].mxu0
  %v126 = vadd.f32 %v38, %v125
  %v127 = vpop.f32.mrb[0].mxu0
  %128 = vmatprep.mubr.f32.mxu0 0.0
  %129 = vmatmul.mubr.f32.gmra.mrb[0].mxu0 %v49
  %v130 = vpop.f32.mrb[0].mxu0
  %v131 = vadd.f32 %v39, %v130
  %v132 = vpop.f32.mrb[0].mxu0
  %133 = vmatprep.mubr.f32.mxu0 0.0
  %134 = vmatmul.mubr.f32.gmra.mrb[0].mxu0 %v52
  %v135 = vpop.f32.mrb[0].mxu0
  %v136 = vadd.f32 %v40, %v135
  %v137 = vpop.f32.mrb[0].mxu0
  %138 = vdwg.mxu0
  %140 = vset.pattern.permute.xlu0 0
  %141 = vperm.xlu0 %140, %v33
  %v142 = vpop.permute.xlu0 %141
  %145 = vset.pattern.permute.xlu0 0
  %146 = vperm.xlu0 %145, %v34
  %v147 = vpop.permute.xlu0 %146
  %150 = vset.pattern.permute.xlu0 0
  %151 = vperm.xlu0 %150, %v35
  %v152 = vpop.permute.xlu0 %151
  %155 = vset.pattern.permute.xlu0 0
  %156 = vperm.xlu0 %155, %v36
  %v157 = vpop.permute.xlu0 %156
  %v159 = vmul.f32 %v142, %v121
  %v160 = vmul.f32 %v147, %v126
  %v161 = vmul.f32 %v152, %v131
  %v162 = vmul.f32 %v157, %v136
  %v163 = vld [vmem:[%s4] sm:$0x1]
  %v165 = vlaneseq
  %v166 = vshrl.u32 %v165, 7
  %v167 = vsub.s32 0, %v166
  %v168 = vrot.slane %v163, %v167
  %v170 = vadd.f32 %v159, %v168
  %v171 = vadd.f32 %v160, %v168
  %v172 = vadd.f32 %v161, %v168
  %v173 = vadd.f32 %v162, %v168
  %v174 = vmax.f32 %v170, 0.0
  %v175 = vmax.f32 %v171, 0.0
  %v176 = vmax.f32 %v172, 0.0
  %v177 = vmax.f32 %v173, 0.0
  %178 = vst [vmem:[%s6] sm:$0xff] %v174
  %179 = vst [vmem:[%s6 + $0x8] sm:$0xff] %v175
  %180 = vst [vmem:[%s6 + $0x10] sm:$0xff] %v176
  %181 = vst [vmem:[%s6 + $0x18] sm:$0xff] %v177
  %v182 = vld [vmem:[%s5] sm:$0x1]
  %v183 = vmul.f32 %v182, %v182
  %vm184 = vcmask 1040384
  %v185 = vsel %vm184, %v183, 0.0
  %186 = vadd.xlane.f32.xlu0 %v185
  %v187 = vpop.xlane.xlu0 %186
  %v188 = vrot.slane %v187, 4
  %v189 = vadd.f32 %v187, %v188
  %v190 = vrot.slane %v189, 2
  %v191 = vadd.f32 %v189, %v190
  %v192 = vrot.slane %v191, 1
  %v193 = vadd.f32 %v191, %v192
  %s194 = vtos %v193
  %v195 = vstv %s194
  %v196 = vrsqrt.pop %v195
  %v198 = vlaneseq
  %v199 = vshrl.u32 %v198, 7
  %v200 = vsub.s32 0, %v199
  %v201 = vrot.slane %v182, %v200
  %203 = vmatprep.subr.mxu0 0.0
  %204 = vmatpush1.xpose.msra.mxu0 %v174
  %205 = vmatprep.subr.mxu0 0.0
  %206 = vmatpush1.xpose.msra.mxu0 %v175
  %207 = vmatprep.subr.mxu0 0.0
  %208 = vmatpush1.xpose.msra.mxu0 %v176
  %209 = vmatprep.subr.mxu0 0.0
  %210 = vmatpush1.xpose.msra.mxu0 %v177
  %211 = vmatprep.subr.mxu0 0.0
  %212 = vmatpush1.xpose.msra.mxu0 0.0
  %213 = vmatprep.subr.mxu0 0.0
  %214 = vmatpush1.xpose.msra.mxu0 0.0
  %215 = vmatprep.subr.mxu0 0.0
  %216 = vmatpush1.xpose.msra.mxu0 0.0
  %217 = vmatprep.subr.mxu0 0.0
  %218 = vmatpush1.xpose.msra.mxu0 0.0
  %219 = vmatprep.subr.mxu0 0.0
  %220 = vmatpush1.xpose.msra.mxu0 0.0
  %221 = vmatprep.subr.mxu0 0.0
  %222 = vmatpush1.xpose.msra.mxu0 0.0
  %223 = vmatprep.subr.mxu0 0.0
  %224 = vmatpush1.xpose.msra.mxu0 0.0
  %225 = vmatprep.subr.mxu0 0.0
  %226 = vmatpush1.xpose.msra.mxu0 0.0
  %227 = vmatprep.subr.mxu0 0.0
  %228 = vmatpush1.xpose.msra.mxu0 0.0
  %229 = vmatprep.subr.mxu0 0.0
  %230 = vmatpush1.xpose.msra.mxu0 0.0
  %231 = vmatprep.subr.mxu0 0.0
  %232 = vmatpush1.xpose.msra.mxu0 0.0
  %233 = vmatprep.subr.mxu0 0.0
  %234 = vmatpush1.xpose.msra.mxu0 0.0
  %235 = vmatprep.subr.mxu0 0.0
  %236 = vmatpush1.xpose.msra.mxu0 0.0
  %237 = vmatprep.subr.mxu0 0.0
  %238 = vmatpush1.xpose.msra.mxu0 0.0
  %239 = vmatprep.subr.mxu0 0.0
  %240 = vmatpush1.xpose.msra.mxu0 0.0
  %241 = vmatprep.subr.mxu0 0.0
  %242 = vmatpush1.xpose.msra.mxu0 0.0
  %243 = vmatprep.subr.mxu0 0.0
  %244 = vmatpush1.xpose.msra.mxu0 0.0
  %245 = vmatprep.subr.mxu0 0.0
  %246 = vmatpush1.xpose.msra.mxu0 0.0
  %247 = vmatprep.subr.mxu0 0.0
  %248 = vmatpush1.xpose.msra.mxu0 0.0
  %249 = vmatprep.subr.mxu0 0.0
  %250 = vmatpush1.xpose.msra.mxu0 0.0
  %251 = vmatprep.subr.mxu0 0.0
  %252 = vmatpush1.xpose.msra.mxu0 0.0
  %253 = vmatprep.subr.mxu0 0.0
  %254 = vmatpush1.xpose.msra.mxu0 0.0
  %255 = vmatprep.subr.mxu0 0.0
  %256 = vmatpush1.xpose.msra.mxu0 0.0
  %257 = vmatprep.subr.mxu0 0.0
  %258 = vmatpush1.xpose.msra.mxu0 0.0
  %259 = vmatprep.subr.mxu0 0.0
  %260 = vmatpush1.xpose.msra.mxu0 0.0
  %261 = vmatprep.subr.mxu0 0.0
  %262 = vmatpush1.xpose.msra.mxu0 0.0
  %263 = vmatprep.subr.mxu0 0.0
  %264 = vmatpush1.xpose.msra.mxu0 0.0
  %265 = vmatprep.subr.mxu0 0.0
  %266 = vmatpush1.xpose.msra.mxu0 0.0
  %267 = vmatprep.mubr.f32.mxu0 0.0
  %268 = vmatmul.mubr.f32.gmra.mrb[0].mxu0 %v201
  %v269 = vpop.f32.mrb[0].mxu0
  %v270 = vadd.f32 0.0, %v269
  %v271 = vpop.f32.mrb[0].mxu0
  %272 = vdwg.mxu0
  %v273 = vmul.f32 %v270, %v196
  %v274 = vtanh.pop %v273
  %vm275 = vcmask 253952
  %276 = vst.msk [vmem:[%s7] sm:$0x1] %vm275, %v274
  // Predicated region
  $region26: #{net_forward.11} parent=0 // pred_check
    _
  $region27: #{net_forward.11} parent=0 // pred_check_branch
    %278 = sbr.rel (0) target = $region29
  $region28: #{net_forward.11} parent=0 // pred_region
    _
  $region29: #{net_forward.11} parent=0 // pred_fallthru
    _
  // Predicated region
  $region30: #{net_forward.11} parent=0 // pred_check
    _
  $region31: #{net_forward.11} parent=0 // pred_check_branch
    %280 = sbr.rel (0) target = $region33
  $region32: #{net_forward.11} parent=0 // pred_region
    _
  $region33: #{net_forward.11} parent=0 // pred_fallthru
    _
  // Predicated region
  $region34: #{net_forward.11} parent=0 // pred_check
    _
  $region35: #{net_forward.11} parent=0 // pred_check_branch
    %282 = sbr.rel (0) target = $region37
  $region36: #{net_forward.11} parent=0 // pred_region
    _
  $region37: #{net_forward.11} parent=0 // pred_fallthru
    _
  // Predicated region
  $region38: #{net_forward.11} parent=0 // pred_check
    _
  $region39: #{net_forward.11} parent=0 // pred_check_branch
    %284 = sbr.rel (0) target = $region41
  $region40: #{net_forward.11} parent=0 // pred_region
    _
  $region41: #{net_forward.11} parent=0 // pred_fallthru
    _

// kernel: net_forward.13
$region0: #{net_forward.13}
  #allocation0 [shape = 'u32[]', space=smem, size = 0x4, offset = 0x4, fixed_abs, tag = 'smem constant byte address 0x4 - core index']
  #allocation1 [shape = 'u32[144,128]{1,0:T(1,128)}', space=vmem, size = 0x12000, scoped, tag = 'internal scratch']
  %s0 = inlined_call_operand.vmem [shape: f32[26,128], index: 0, kind: input, shape index: {}]
  %s1 = inlined_call_operand.vmem [shape: f32[128,128], index: 1, kind: input, shape index: {}]
  %s2 = inlined_call_operand.vmem [shape: f32[26,1], index: 2, kind: input, shape index: {}]
  %s3 = inlined_call_operand.vmem [shape: f32[26,128], index: 3, kind: output, shape index: {}]
  %s4 = sld [smem:[#allocation0]]
  $region22: #{net_forward.13} parent=0
    _
  %s6 = ssub.s32 1, %s4
  %s7 = scalar_select 0, %s6, %s4
  // Predicated region
  $region2: #{net_forward.13} parent=0 // pred_check
    _
  $region3: #{net_forward.13} parent=0 // pred_check_branch
    %9 = sbr.rel (0) target = $region5
  $region4: #{net_forward.13} parent=0 // pred_region
    _
  $region5: #{net_forward.13} parent=0 // pred_fallthru
    _
  // Predicated region
  $region6: #{net_forward.13} parent=0 // pred_check
    _
  $region7: #{net_forward.13} parent=0 // pred_check_branch
    %11 = sbr.rel (0) target = $region9
  $region8: #{net_forward.13} parent=0 // pred_region
    _
  $region9: #{net_forward.13} parent=0 // pred_fallthru
    _
  // Predicated region
  $region10: #{net_forward.13} parent=0 // pred_check
    _
  $region11: #{net_forward.13} parent=0 // pred_check_branch
    %13 = sbr.rel (0) target = $region13
  $region12: #{net_forward.13} parent=0 // pred_region
    _
  $region13: #{net_forward.13} parent=0 // pred_fallthru
    _
  %v14 = vld [vmem:[%s0] sm:$0xff]
  %v15 = vld [vmem:[%s0 + $0x8] sm:$0xff]
  %v16 = vld [vmem:[%s0 + $0x10] sm:$0xff]
  %v17 = vld [vmem:[%s0 + $0x18] sm:$0x3]
  %v18 = vld [vmem:[%s1] sm:$0xff]
  %v19 = vld [vmem:[%s1 + $0x8] sm:$0xff]
  %v20 = vld [vmem:[%s1 + $0x10] sm:$0xff]
  %v21 = vld [vmem:[%s1 + $0x18] sm:$0xff]
  %v22 = vld [vmem:[%s1 + $0x20] sm:$0xff]
  %v23 = vld [vmem:[%s1 + $0x28] sm:$0xff]
  %v24 = vld [vmem:[%s1 + $0x30] sm:$0xff]
  %v25 = vld [vmem:[%s1 + $0x38] sm:$0xff]
  %v26 = vld [vmem:[%s1 + $0x40] sm:$0xff]
  %v27 = vld [vmem:[%s1 + $0x48] sm:$0xff]
  %v28 = vld [vmem:[%s1 + $0x50] sm:$0xff]
  %v29 = vld [vmem:[%s1 + $0x58] sm:$0xff]
  %v30 = vld [vmem:[%s1 + $0x60] sm:$0xff]
  %v31 = vld [vmem:[%s1 + $0x68] sm:$0xff]
  %v32 = vld [vmem:[%s1 + $0x70] sm:$0xff]
  %v33 = vld [vmem:[%s1 + $0x78] sm:$0xff]
  %34 = vmatprep.subr.mxu0 0.0
  %35 = vmatpush1.msra.mxu0 %v18
  %36 = vmatprep.subr.mxu0 0.0
  %37 = vmatpush1.msra.mxu0 %v19
  %38 = vmatprep.subr.mxu0 0.0
  %39 = vmatpush1.msra.mxu0 %v20
  %40 = vmatprep.subr.mxu0 0.0
  %41 = vmatpush1.msra.mxu0 %v21
  %42 = vmatprep.subr.mxu0 0.0
  %43 = vmatpush1.msra.mxu0 %v22
  %44 = vmatprep.subr.mxu0 0.0
  %45 = vmatpush1.msra.mxu0 %v23
  %46 = vmatprep.subr.mxu0 0.0
  %47 = vmatpush1.msra.mxu0 %v24
  %48 = vmatprep.subr.mxu0 0.0
  %49 = vmatpush1.msra.mxu0 %v25
  %50 = vmatprep.subr.mxu0 0.0
  %51 = vmatpush1.msra.mxu0 %v26
  %52 = vmatprep.subr.mxu0 0.0
  %53 = vmatpush1.msra.mxu0 %v27
  %54 = vmatprep.subr.mxu0 0.0
  %55 = vmatpush1.msra.mxu0 %v28
  %56 = vmatprep.subr.mxu0 0.0
  %57 = vmatpush1.msra.mxu0 %v29
  %58 = vmatprep.subr.mxu0 0.0
  %59 = vmatpush1.msra.mxu0 %v30
  %60 = vmatprep.subr.mxu0 0.0
  %61 = vmatpush1.msra.mxu0 %v31
  %62 = vmatprep.subr.mxu0 0.0
  %63 = vmatpush1.msra.mxu0 %v32
  %64 = vmatprep.subr.mxu0 0.0
  %65 = vmatpush1.msra.mxu0 %v33
  %66 = vmatprep.subr.mxu0 0.0
  %67 = vmatpush1.msra.mxu0 0.0
  %68 = vmatprep.subr.mxu0 0.0
  %69 = vmatpush1.msra.mxu0 0.0
  %70 = vmatprep.subr.mxu0 0.0
  %71 = vmatpush1.msra.mxu0 0.0
  %72 = vmatprep.subr.mxu0 0.0
  %73 = vmatpush1.msra.mxu0 0.0
  %74 = vmatprep.subr.mxu0 0.0
  %75 = vmatpush1.msra.mxu0 0.0
  %76 = vmatprep.subr.mxu0 0.0
  %77 = vmatpush1.msra.mxu0 0.0
  %78 = vmatprep.subr.mxu0 0.0
  %79 = vmatpush1.msra.mxu0 0.0
  %80 = vmatprep.subr.mxu0 0.0
  %81 = vmatpush1.msra.mxu0 0.0
  %82 = vmatprep.subr.mxu0 0.0
  %83 = vmatpush1.msra.mxu0 0.0
  %84 = vmatprep.subr.mxu0 0.0
  %85 = vmatpush1.msra.mxu0 0.0
  %86 = vmatprep.subr.mxu0 0.0
  %87 = vmatpush1.msra.mxu0 0.0
  %88 = vmatprep.subr.mxu0 0.0
  %89 = vmatpush1.msra.mxu0 0.0
  %90 = vmatprep.subr.mxu0 0.0
  %91 = vmatpush1.msra.mxu0 0.0
  %92 = vmatprep.subr.mxu0 0.0
  %93 = vmatpush1.msra.mxu0 0.0
  %94 = vmatprep.subr.mxu0 0.0
  %95 = vmatpush1.msra.mxu0 0.0
  %96 = vmatprep.subr.mxu0 0.0
  %97 = vmatpush1.msra.mxu0 0.0
  %98 = vmatprep.mubr.f32.mxu0 0.0
  %99 = vmatmul.mubr.f32.gmra.mrb[0].mxu0 %v14
  %v100 = vpop.f32.mrb[0].mxu0
  %v101 = vadd.f32 0.0, %v100
  %v102 = vpop.f32.mrb[0].mxu0
  %103 = vmatprep.mubr.f32.mxu0 0.0
  %104 = vmatmul.mubr.f32.gmra.mrb[0].mxu0 %v15
  %v105 = vpop.f32.mrb[0].mxu0
  %v106 = vadd.f32 0.0, %v105
  %v107 = vpop.f32.mrb[0].mxu0
  %108 = vmatprep.mubr.f32.mxu0 0.0
  %109 = vmatmul.mubr.f32.gmra.mrb[0].mxu0 %v16
  %v110 = vpop.f32.mrb[0].mxu0
  %v111 = vadd.f32 0.0, %v110
  %v112 = vpop.f32.mrb[0].mxu0
  %113 = vmatprep.mubr.f32.mxu0 0.0
  %114 = vmatmul.mubr.f32.gmra.mrb[0].mxu0 %v17
  %v115 = vpop.f32.mrb[0].mxu0
  %v116 = vadd.f32 0.0, %v115
  %v117 = vpop.f32.mrb[0].mxu0
  %118 = vdwg.mxu0
  %v119 = vld [vmem:[%s2] sm:$0xff]
  %v120 = vld [vmem:[%s2 + $0x8] sm:$0xff]
  %v121 = vld [vmem:[%s2 + $0x10] sm:$0xff]
  %v122 = vld [vmem:[%s2 + $0x18] sm:$0x3]
  %124 = vset.pattern.permute.xlu0 0
  %125 = vperm.xlu0 %124, %v119
  %v126 = vpop.permute.xlu0 %125
  %129 = vset.pattern.permute.xlu0 0
  %130 = vperm.xlu0 %129, %v120
  %v131 = vpop.permute.xlu0 %130
  %134 = vset.pattern.permute.xlu0 0
  %135 = vperm.xlu0 %134, %v121
  %v136 = vpop.permute.xlu0 %135
  %139 = vset.pattern.permute.xlu0 0
  %140 = vperm.xlu0 %139, %v122
  %v141 = vpop.permute.xlu0 %140
  %v143 = vmul.f32 %v126, %v101
  %v144 = vmul.f32 %v131, %v106
  %v145 = vmul.f32 %v136, %v111
  %v146 = vmul.f32 %v141, %v116
  %147 = vst [vmem:[%s3] sm:$0xff] %v143
  %148 = vst [vmem:[%s3 + $0x8] sm:$0xff] %v144
  %149 = vst [vmem:[%s3 + $0x10] sm:$0xff] %v145
  %150 = vst [vmem:[%s3 + $0x18] sm:$0x3] %v146
  // Predicated region
  $region14: #{net_forward.13} parent=0 // pred_check
    _
  $region15: #{net_forward.13} parent=0 // pred_check_branch
    %152 = sbr.rel (0) target = $region17
  $region16: #{net_forward.13} parent=0 // pred_region
    _
  $region17: #{net_forward.13} parent=0 // pred_fallthru
    _
  // Predicated region
  $region18: #{net_forward.13} parent=0 // pred_check
    _
  $region19: #{net_forward.13} parent=0 // pred_check_branch
    %154 = sbr.rel (0) target = $region21
  $region20: #{net_forward.13} parent=0 // pred_region
    _
  $region21: #{net_forward.13} parent=0 // pred_fallthru
    _

// kernel: mul.22
$region0: #{mul.22}
  %s0 = inlined_call_operand.vmem [shape: f32[2,11], index: 0, kind: input, shape index: {}]
  %s1 = inlined_call_operand.vmem [shape: f32[22], index: 1, kind: output, shape index: {}]
  $region1: #{mul.22} parent=0
    #allocation0 [shape = 'u8[4096]{0}', space=vmem, size = 0x1000, scoped, tag = 'scoped mem for output reshape']
    #allocation1 [shape = 'u8[4096]{0}', space=vmem, size = 0x1000, scoped, tag = 'scoped mem for input reshape']
    %s3 = sshllo.u32 0, 2
    %v4 = vld [vmem:[%s0] sm:%s3]
    %5 = vst [vmem:[#allocation1] sm:%s3] %v4
    %v6 = vld [vmem:[#allocation1] sm:$0x1]
    %vm7 = vcmask 89088
    %8 = vst.msk [vmem:[#allocation0] sm:$0x1] %vm7, %v6
    %s9 = scalar_lea.vmem [#allocation1], 1
    %v10 = vld [vmem:[%s9] sm:$0x1]
    %11 = vrot.lane.b32.xlu0 %v10, 11
    %v12 = vpop.permute.xlu0 %11
    %vm13 = vcmask 179288
    %14 = vst.msk [vmem:[#allocation0] sm:$0x1] %vm13, %v12
    %s16 = sshllo.u32 0, 1
    %v18 = vld [vmem:[#allocation0] sm:%s16]
    %s19 = sshllo.u32 0, 1
    %20 = vst [vmem:[%s1] sm:%s19] %v18

// kernel: net_forward.14
$region0: #{net_forward.14}
  #allocation0 [shape = 'u32[]', space=smem, size = 0x4, offset = 0x4, fixed_abs, tag = 'smem constant byte address 0x4 - core index']
  #allocation1 [shape = 'u32[144,128]{1,0:T(1,128)}', space=vmem, size = 0x12000, scoped, tag = 'internal scratch']
  %s0 = inlined_call_operand.vmem [shape: f32[26,26], index: 0, kind: input, shape index: {}]
  %s1 = inlined_call_operand.vmem [shape: f32[26,128], index: 1, kind: input, shape index: {}, may-alias: {1,2}]
  %s2 = inlined_call_operand.vmem [shape: f32[26,128], index: 2, kind: input, shape index: {}, may-alias: {1,2}]
  %s3 = inlined_call_operand.vmem [shape: f32[26,1], index: 3, kind: input, shape index: {}]
  %s4 = inlined_call_operand.vmem [shape: f32[1,128], index: 4, kind: input, shape index: {}]
  %s5 = inlined_call_operand.vmem [shape: f32[1,128], index: 5, kind: input, shape index: {}]
  %s6 = inlined_call_operand.vmem [shape: f32[26,128], index: 6, kind: output, shape index: {0}]
  %s7 = inlined_call_operand.vmem [shape: f32[1,26], index: 7, kind: output, shape index: {1}]
  %8 = xla_tuple %s6, %s7
  %s9 = sld [smem:[#allocation0]]
  $region42: #{net_forward.14} parent=0
    _
  %s11 = ssub.s32 1, %s9
  %s12 = scalar_select 0, %s11, %s9
  // Predicated region
  $region2: #{net_forward.14} parent=0 // pred_check
    _
  $region3: #{net_forward.14} parent=0 // pred_check_branch
    %14 = sbr.rel (0) target = $region5
  $region4: #{net_forward.14} parent=0 // pred_region
    _
  $region5: #{net_forward.14} parent=0 // pred_fallthru
    _
  // Predicated region
  $region6: #{net_forward.14} parent=0 // pred_check
    _
  $region7: #{net_forward.14} parent=0 // pred_check_branch
    %16 = sbr.rel (0) target = $region9
  $region8: #{net_forward.14} parent=0 // pred_region
    _
  $region9: #{net_forward.14} parent=0 // pred_fallthru
    _
  // Predicated region
  $region10: #{net_forward.14} parent=0 // pred_check
    _
  $region11: #{net_forward.14} parent=0 // pred_check_branch
    %18 = sbr.rel (0) target = $region13
  $region12: #{net_forward.14} parent=0 // pred_region
    _
  $region13: #{net_forward.14} parent=0 // pred_fallthru
    _
  // Predicated region
  $region14: #{net_forward.14} parent=0 // pred_check
    _
  $region15: #{net_forward.14} parent=0 // pred_check_branch
    %20 = sbr.rel (0) target = $region17
  $region16: #{net_forward.14} parent=0 // pred_region
    _
  $region17: #{net_forward.14} parent=0 // pred_fallthru
    _
  // Predicated region
  $region18: #{net_forward.14} parent=0 // pred_check
    _
  $region19: #{net_forward.14} parent=0 // pred_check_branch
    %22 = sbr.rel (0) target = $region21
  $region20: #{net_forward.14} parent=0 // pred_region
    _
  $region21: #{net_forward.14} parent=0 // pred_fallthru
    _
  // Predicated region
  $region22: #{net_forward.14} parent=0 // pred_check
    _
  $region23: #{net_forward.14} parent=0 // pred_check_branch
    %24 = sbr.rel (0) target = $region25
  $region24: #{net_forward.14} parent=0 // pred_region
    _
  $region25: #{net_forward.14} parent=0 // pred_fallthru
    _
  %v25 = vld [vmem:[%s0] sm:$0xff]
  %v26 = vld [vmem:[%s0 + $0x8] sm:$0xff]
  %v27 = vld [vmem:[%s0 + $0x10] sm:$0xff]
  %v28 = vld [vmem:[%s0 + $0x18] sm:$0x3]
  %v29 = vld [vmem:[%s1] sm:$0xff]
  %v30 = vld [vmem:[%s1 + $0x8] sm:$0xff]
  %v31 = vld [vmem:[%s1 + $0x10] sm:$0xff]
  %v32 = vld [vmem:[%s1 + $0x18] sm:$0x3]
  %v33 = vld [vmem:[%s3] sm:$0xff]
  %v34 = vld [vmem:[%s3 + $0x8] sm:$0xff]
  %v35 = vld [vmem:[%s3 + $0x10] sm:$0xff]
  %v36 = vld [vmem:[%s3 + $0x18] sm:$0x3]
  %v37 = vld [vmem:[%s2] sm:$0xff]
  %v38 = vld [vmem:[%s2 + $0x8] sm:$0xff]
  %v39 = vld [vmem:[%s2 + $0x10] sm:$0xff]
  %v40 = vld [vmem:[%s2 + $0x18] sm:$0x3]
  %vm41 = vcmask 211968
  %v43 = vsel %vm41, %v25, 0
  %v46 = vsel %vm41, %v26, 0
  %v49 = vsel %vm41, %v27, 0
  %v52 = vsel %vm41, %v28, 0
  %vm54 = vcmask 1041408
  %v56 = vsel %vm54, %v32, 0
  %58 = vmatprep.subr.mxu0 0.0
  %59 = vmatpush1.msra.mxu0 %v29
  %60 = vmatprep.subr.mxu0 0.0
  %61 = vmatpush1.msra.mxu0 %v30
  %62 = vmatprep.subr.mxu0 0.0
  %63 = vmatpush1.msra.mxu0 %v31
  %64 = vmatprep.subr.mxu0 0.0
  %65 = vmatpush1.msra.mxu0 %v56
  %66 = vmatprep.subr.mxu0 0.0
  %67 = vmatpush1.msra.mxu0 0.0
  %68 = vmatprep.subr.mxu0 0.0
  %69 = vmatpush1.msra.mxu0 0.0
  %70 = vmatprep.subr.mxu0 0.0
  %71 = vmatpush1.msra.mxu0 0.0
  %72 = vmatprep.subr.mxu0 0.0
  %73 = vmatpush1.msra.mxu0 0.0
  %74 = vmatprep.subr.mxu0 0.0
  %75 = vmatpush1.msra.mxu0 0.0
  %76 = vmatprep.subr.mxu0 0.0
  %77 = vmatpush1.msra.mxu0 0.0
  %78 = vmatprep.subr.mxu0 0.0
  %79 = vmatpush1.msra.mxu0 0.0
  %80 = vmatprep.subr.mxu0 0.0
  %81 = vmatpush1.msra.mxu0 0.0
  %82 = vmatprep.subr.mxu0 0.0
  %83 = vmatpush1.msra.mxu0 0.0
  %84 = vmatprep.subr.mxu0 0.0
  %85 = vmatpush1.msra.mxu0 0.0
  %86 = vmatprep.subr.mxu0 0.0
  %87 = vmatpush1.msra.mxu0 0.0
  %88 = vmatprep.subr.mxu0 0.0
  %89 = vmatpush1.msra.mxu0 0.0
  %90 = vmatprep.subr.mxu0 0.0
  %91 = vmatpush1.msra.mxu0 0.0
  %92 = vmatprep.subr.mxu0 0.0
  %93 = vmatpush1.msra.mxu0 0.0
  %94 = vmatprep.subr.mxu0 0.0
  %95 = vmatpush1.msra.mxu0 0.0
  %96 = vmatprep.subr.mxu0 0.0
  %97 = vmatpush1.msra.mxu0 0.0
  %98 = vmatprep.subr.mxu0 0.0
  %99 = vmatpush1.msra.mxu0 0.0
  %100 = vmatprep.subr.mxu0 0.0
  %101 = vmatpush1.msra.mxu0 0.0
  %102 = vmatprep.subr.mxu0 0.0
  %103 = vmatpush1.msra.mxu0 0.0
  %104 = vmatprep.subr.mxu0 0.0
  %105 = vmatpush1.msra.mxu0 0.0
  %106 = vmatprep.subr.mxu0 0.0
  %107 = vmatpush1.msra.mxu0 0.0
  %108 = vmatprep.subr.mxu0 0.0
  %109 = vmatpush1.msra.mxu0 0.0
  %110 = vmatprep.subr.mxu0 0.0
  %111 = vmatpush1.msra.mxu0 0.0
  %112 = vmatprep.subr.mxu0 0.0
  %113 = vmatpush1.msra.mxu0 0.0
  %114 = vmatprep.subr.mxu0 0.0
  %115 = vmatpush1.msra.mxu0 0.0
  %116 = vmatprep.subr.mxu0 0.0
  %117 = vmatpush1.msra.mxu0 0.0
  %118 = vmatprep.subr.mxu0 0.0
  %119 = vmatpush1.msra.mxu0 0.0
  %120 = vmatprep.subr.mxu0 0.0
  %121 = vmatpush1.msra.mxu0 0.0
  %122 = vmatprep.mubr.f32.mxu0 0.0
  %123 = vmatmul.mubr.f32.gmra.mrb[0].mxu0 %v43
  %v124 = vpop.f32.mrb[0].mxu0
  %v125 = vadd.f32 %v37, %v124
  %v126 = vpop.f32.mrb[0].mxu0
  %127 = vmatprep.mubr.f32.mxu0 0.0
  %128 = vmatmul.mubr.f32.gmra.mrb[0].mxu0 %v46
  %v129 = vpop.f32.mrb[0].mxu0
  %v130 = vadd.f32 %v38, %v129
  %v131 = vpop.f32.mrb[0].mxu0
  %132 = vmatprep.mubr.f32.mxu0 0.0
  %133 = vmatmul.mubr.f32.gmra.mrb[0].mxu0 %v49
  %v134 = vpop.f32.mrb[0].mxu0
  %v135 = vadd.f32 %v39, %v134
  %v136 = vpop.f32.mrb[0].mxu0
  %137 = vmatprep.mubr.f32.mxu0 0.0
  %138 = vmatmul.mubr.f32.gmra.mrb[0].mxu0 %v52
  %v139 = vpop.f32.mrb[0].mxu0
  %v140 = vadd.f32 %v40, %v139
  %v141 = vpop.f32.mrb[0].mxu0
  %142 = vdwg.mxu0
  %144 = vset.pattern.permute.xlu0 0
  %145 = vperm.xlu0 %144, %v33
  %v146 = vpop.permute.xlu0 %145
  %149 = vset.pattern.permute.xlu0 0
  %150 = vperm.xlu0 %149, %v34
  %v151 = vpop.permute.xlu0 %150
  %154 = vset.pattern.permute.xlu0 0
  %155 = vperm.xlu0 %154, %v35
  %v156 = vpop.permute.xlu0 %155
  %159 = vset.pattern.permute.xlu0 0
  %160 = vperm.xlu0 %159, %v36
  %v161 = vpop.permute.xlu0 %160
  %v163 = vmul.f32 %v146, %v125
  %v164 = vmul.f32 %v151, %v130
  %v165 = vmul.f32 %v156, %v135
  %v166 = vmul.f32 %v161, %v140
  %v167 = vld [vmem:[%s4] sm:$0x1]
  %v169 = vlaneseq
  %v170 = vshrl.u32 %v169, 7
  %v171 = vsub.s32 0, %v170
  %v172 = vrot.slane %v167, %v171
  %v174 = vadd.f32 %v163, %v172
  %v175 = vadd.f32 %v164, %v172
  %v176 = vadd.f32 %v165, %v172
  %v177 = vadd.f32 %v166, %v172
  %v178 = vmax.f32 %v174, 0.0
  %v179 = vmax.f32 %v175, 0.0
  %v180 = vmax.f32 %v176, 0.0
  %v181 = vmax.f32 %v177, 0.0
  %182 = vst [vmem:[%s6] sm:$0xff] %v178
  %183 = vst [vmem:[%s6 + $0x8] sm:$0xff] %v179
  %184 = vst [vmem:[%s6 + $0x10] sm:$0xff] %v180
  %185 = vst [vmem:[%s6 + $0x18] sm:$0x3] %v181
  %v186 = vld [vmem:[%s5] sm:$0x1]
  %v187 = vmul.f32 %v186, %v186
  %vm188 = vcmask 1040384
  %v189 = vsel %vm188, %v187, 0.0
  %190 = vadd.xlane.f32.xlu0 %v189
  %v191 = vpop.xlane.xlu0 %190
  %v192 = vrot.slane %v191, 4
  %v193 = vadd.f32 %v191, %v192
  %v194 = vrot.slane %v193, 2
  %v195 = vadd.f32 %v193, %v194
  %v196 = vrot.slane %v195, 1
  %v197 = vadd.f32 %v195, %v196
  %s198 = vtos %v197
  %v199 = vstv %s198
  %v200 = vrsqrt.pop %v199
  %v202 = vlaneseq
  %v203 = vshrl.u32 %v202, 7
  %v204 = vsub.s32 0, %v203
  %v205 = vrot.slane %v186, %v204
  %207 = vmatprep.subr.mxu0 0.0
  %208 = vmatpush1.xpose.msra.mxu0 %v178
  %209 = vmatprep.subr.mxu0 0.0
  %210 = vmatpush1.xpose.msra.mxu0 %v179
  %211 = vmatprep.subr.mxu0 0.0
  %212 = vmatpush1.xpose.msra.mxu0 %v180
  %213 = vmatprep.subr.mxu0 0.0
  %214 = vmatpush1.xpose.msra.mxu0 %v181
  %215 = vmatprep.subr.mxu0 0.0
  %216 = vmatpush1.xpose.msra.mxu0 0.0
  %217 = vmatprep.subr.mxu0 0.0
  %218 = vmatpush1.xpose.msra.mxu0 0.0
  %219 = vmatprep.subr.mxu0 0.0
  %220 = vmatpush1.xpose.msra.mxu0 0.0
  %221 = vmatprep.subr.mxu0 0.0
  %222 = vmatpush1.xpose.msra.mxu0 0.0
  %223 = vmatprep.subr.mxu0 0.0
  %224 = vmatpush1.xpose.msra.mxu0 0.0
  %225 = vmatprep.subr.mxu0 0.0
  %226 = vmatpush1.xpose.msra.mxu0 0.0
  %227 = vmatprep.subr.mxu0 0.0
  %228 = vmatpush1.xpose.msra.mxu0 0.0
  %229 = vmatprep.subr.mxu0 0.0
  %230 = vmatpush1.xpose.msra.mxu0 0.0
  %231 = vmatprep.subr.mxu0 0.0
  %232 = vmatpush1.xpose.msra.mxu0 0.0
  %233 = vmatprep.subr.mxu0 0.0
  %234 = vmatpush1.xpose.msra.mxu0 0.0
  %235 = vmatprep.subr.mxu0 0.0
  %236 = vmatpush1.xpose.msra.mxu0 0.0
  %237 = vmatprep.subr.mxu0 0.0
  %238 = vmatpush1.xpose.msra.mxu0 0.0
  %239 = vmatprep.subr.mxu0 0.0
  %240 = vmatpush1.xpose.msra.mxu0 0.0
  %241 = vmatprep.subr.mxu0 0.0
  %242 = vmatpush1.xpose.msra.mxu0 0.0
  %243 = vmatprep.subr.mxu0 0.0
  %244 = vmatpush1.xpose.msra.mxu0 0.0
  %245 = vmatprep.subr.mxu0 0.0
  %246 = vmatpush1.xpose.msra.mxu0 0.0
  %247 = vmatprep.subr.mxu0 0.0
  %248 = vmatpush1.xpose.msra.mxu0 0.0
  %249 = vmatprep.subr.mxu0 0.0
  %250 = vmatpush1.xpose.msra.mxu0 0.0
  %251 = vmatprep.subr.mxu0 0.0
  %252 = vmatpush1.xpose.msra.mxu0 0.0
  %253 = vmatprep.subr.mxu0 0.0
  %254 = vmatpush1.xpose.msra.mxu0 0.0
  %255 = vmatprep.subr.mxu0 0.0
  %256 = vmatpush1.xpose.msra.mxu0 0.0
  %257 = vmatprep.subr.mxu0 0.0
  %258 = vmatpush1.xpose.msra.mxu0 0.0
  %259 = vmatprep.subr.mxu0 0.0
  %260 = vmatpush1.xpose.msra.mxu0 0.0
  %261 = vmatprep.subr.mxu0 0.0
  %262 = vmatpush1.xpose.msra.mxu0 0.0
  %263 = vmatprep.subr.mxu0 0.0
  %264 = vmatpush1.xpose.msra.mxu0 0.0
  %265 = vmatprep.subr.mxu0 0.0
  %266 = vmatpush1.xpose.msra.mxu0 0.0
  %267 = vmatprep.subr.mxu0 0.0
  %268 = vmatpush1.xpose.msra.mxu0 0.0
  %269 = vmatprep.subr.mxu0 0.0
  %270 = vmatpush1.xpose.msra.mxu0 0.0
  %271 = vmatprep.mubr.f32.mxu0 0.0
  %272 = vmatmul.mubr.f32.gmra.mrb[0].mxu0 %v205
  %v273 = vpop.f32.mrb[0].mxu0
  %v274 = vadd.f32 0.0, %v273
  %v275 = vpop.f32.mrb[0].mxu0
  %276 = vdwg.mxu0
  %v277 = vmul.f32 %v274, %v200
  %v278 = vtanh.pop %v277
  %vm279 = vcmask 204800
  %280 = vst.msk [vmem:[%s7] sm:$0x1] %vm279, %v278
  // Predicated region
  $region26: #{net_forward.14} parent=0 // pred_check
    _
  $region27: #{net_forward.14} parent=0 // pred_check_branch
    %282 = sbr.rel (0) target = $region29
  $region28: #{net_forward.14} parent=0 // pred_region
    _
  $region29: #{net_forward.14} parent=0 // pred_fallthru
    _
  // Predicated region
  $region30: #{net_forward.14} parent=0 // pred_check
    _
  $region31: #{net_forward.14} parent=0 // pred_check_branch
    %284 = sbr.rel (0) target = $region33
  $region32: #{net_forward.14} parent=0 // pred_region
    _
  $region33: #{net_forward.14} parent=0 // pred_fallthru
    _
  // Predicated region
  $region34: #{net_forward.14} parent=0 // pred_check
    _
  $region35: #{net_forward.14} parent=0 // pred_check_branch
    %286 = sbr.rel (0) target = $region37
  $region36: #{net_forward.14} parent=0 // pred_region
    _
  $region37: #{net_forward.14} parent=0 // pred_fallthru
    _
  // Predicated region
  $region38: #{net_forward.14} parent=0 // pred_check
    _
  $region39: #{net_forward.14} parent=0 // pred_check_branch
    %288 = sbr.rel (0) target = $region41
  $region40: #{net_forward.14} parent=0 // pred_region
    _
  $region41: #{net_forward.14} parent=0 // pred_fallthru
    _

// kernel: net_forward.15
$region0: #{net_forward.15}
  #allocation0 [shape = 'u32[]', space=smem, size = 0x4, offset = 0x4, fixed_abs, tag = 'smem constant byte address 0x4 - core index']
  #allocation1 [shape = 'u32[144,128]{1,0:T(1,128)}', space=vmem, size = 0x12000, scoped, tag = 'internal scratch']
  %s0 = inlined_call_operand.vmem [shape: f32[2,11,128], index: 0, kind: input, shape index: {}]
  %s1 = inlined_call_operand.vmem [shape: f32[2,256], index: 1, kind: output, shape index: {}]
  %s2 = sld [smem:[#allocation0]]
  $region14: #{net_forward.15} parent=0
    _
  %s4 = ssub.s32 1, %s2
  %s5 = scalar_select 0, %s4, %s2
  // Predicated region
  $region2: #{net_forward.15} parent=0 // pred_check
    _
  $region3: #{net_forward.15} parent=0 // pred_check_branch
    %7 = sbr.rel (0) target = $region5
  $region4: #{net_forward.15} parent=0 // pred_region
    _
  $region5: #{net_forward.15} parent=0 // pred_fallthru
    _
  %v8 = vld [vmem:[%s0] sm:$0xff]
  %v9 = vld [vmem:[%s0 + $0x8] sm:$0x7]
  %v10 = vld [vmem:[%s0 + $0x10] sm:$0xff]
  %v11 = vld [vmem:[%s0 + $0x18] sm:$0x7]
  %vm12 = vcmask 1042432
  %v13 = vsel %vm12, %v9, -inf
  %v14 = vmax.f32 %v8, %v13
  %v15 = vrot.slane %v14, 4
  %v16 = vmax.f32 %v14, %v15
  %v17 = vrot.slane %v16, 2
  %v18 = vmax.f32 %v16, %v17
  %v19 = vrot.slane %v18, 1
  %v20 = vmax.f32 %v18, %v19
  %v21 = vsel %vm12, %v11, -inf
  %v22 = vmax.f32 %v10, %v21
  %v23 = vrot.slane %v22, 4
  %v24 = vmax.f32 %v22, %v23
  %v25 = vrot.slane %v24, 2
  %v26 = vmax.f32 %v24, %v25
  %v27 = vrot.slane %v26, 1
  %v28 = vmax.f32 %v26, %v27
  %v32 = vunpack.c.l.s4 1983009808
  %v33 = vunpack.c.0.s8 %v32
  %v34 = vlaneseq
  %v35 = vshrl.u32 %v34, 7
  %v36 = vsub.s32 %v33, %v35
  %v37 = vrot.slane %v20, %v36
  %v39 = vunpack.c.l.s4 1983009808
  %v40 = vunpack.c.0.s8 %v39
  %v41 = vlaneseq
  %v42 = vshrl.u32 %v41, 7
  %v43 = vsub.s32 %v40, %v42
  %v44 = vrot.slane %v28, %v43
  %vm45 = vcmask 1044484
  %v46 = vsel %vm45, %v37, %v37
  %vm47 = vcmask 1046534
  %v48 = vsel %vm47, %v37, %v46
  %v49 = vrot.slane %v44, 7
  %vm50 = vcmask 1041409
  %v51 = vsel %vm50, %v49, %v48
  %vm52 = vcmask 1043459
  %v53 = vsel %vm52, %v49, %v51
  %vm54 = vcmask 1045509
  %v55 = vsel %vm54, %v49, %v53
  %vm56 = vcmask 1047559
  %v57 = vsel %vm56, %v49, %v55
  %59 = vst [vmem:[%s1] sm:$0x3] %v57
  %v60 = vsel %vm12, %v9, 0.0
  %v61 = vadd.f32 %v8, %v60
  %v62 = vrot.slane %v61, 4
  %v63 = vadd.f32 %v61, %v62
  %v64 = vrot.slane %v63, 2
  %v65 = vadd.f32 %v63, %v64
  %v66 = vrot.slane %v65, 1
  %v67 = vadd.f32 %v65, %v66
  %v68 = vsel %vm12, %v11, 0.0
  %v69 = vadd.f32 %v10, %v68
  %v70 = vrot.slane %v69, 4
  %v71 = vadd.f32 %v69, %v70
  %v72 = vrot.slane %v71, 2
  %v73 = vadd.f32 %v71, %v72
  %v74 = vrot.slane %v73, 1
  %v75 = vadd.f32 %v73, %v74
  %v76 = vmul.f32 %v67, 0.09090909
  %v77 = vmul.f32 %v75, 0.09090909
  %v81 = vunpack.c.l.s4 1983009808
  %v82 = vunpack.c.0.s8 %v81
  %v83 = vlaneseq
  %v84 = vshrl.u32 %v83, 7
  %v85 = vsub.s32 %v82, %v84
  %v86 = vrot.slane %v76, %v85
  %v88 = vunpack.c.l.s4 1983009808
  %v89 = vunpack.c.0.s8 %v88
  %v90 = vlaneseq
  %v91 = vshrl.u32 %v90, 7
  %v92 = vsub.s32 %v89, %v91
  %v93 = vrot.slane %v77, %v92
  %v94 = vsel %vm45, %v86, %v86
  %v95 = vsel %vm47, %v86, %v94
  %v96 = vrot.slane %v93, 7
  %v97 = vsel %vm50, %v96, %v95
  %v98 = vsel %vm52, %v96, %v97
  %v99 = vsel %vm54, %v96, %v98
  %v100 = vsel %vm56, %v96, %v99
  %102 = vst [vmem:[%s1 + $0x2] sm:$0x3] %v100
  // Predicated region
  $region6: #{net_forward.15} parent=0 // pred_check
    _
  $region7: #{net_forward.15} parent=0 // pred_check_branch
    %104 = sbr.rel (0) target = $region9
  $region8: #{net_forward.15} parent=0 // pred_region
    _
  $region9: #{net_forward.15} parent=0 // pred_fallthru
    _
  // Predicated region
  $region10: #{net_forward.15} parent=0 // pred_check
    _
  $region11: #{net_forward.15} parent=0 // pred_check_branch
    %106 = sbr.rel (0) target = $region13
  $region12: #{net_forward.15} parent=0 // pred_region
    _
  $region13: #{net_forward.15} parent=0 // pred_fallthru
    _

// kernel: net_forward.16
$region0: #{net_forward.16}
  #allocation0 [shape = 'u32[]', space=smem, size = 0x4, offset = 0x4, fixed_abs, tag = 'smem constant byte address 0x4 - core index']
  #allocation1 [shape = 'u32[144,128]{1,0:T(1,128)}', space=vmem, size = 0x12000, scoped, tag = 'internal scratch']
  %s0 = inlined_call_operand.vmem [shape: f32[22,128], index: 0, kind: input, shape index: {}]
  %s1 = inlined_call_operand.vmem [shape: f32[128,128], index: 1, kind: input, shape index: {}]
  %s2 = inlined_call_operand.vmem [shape: f32[22,1], index: 2, kind: input, shape index: {}]
  %s3 = inlined_call_operand.vmem [shape: f32[22,128], index: 3, kind: output, shape index: {}]
  %s4 = sld [smem:[#allocation0]]
  $region22: #{net_forward.16} parent=0
    _
  %s6 = ssub.s32 1, %s4
  %s7 = scalar_select 0, %s6, %s4
  // Predicated region
  $region2: #{net_forward.16} parent=0 // pred_check
    _
  $region3: #{net_forward.16} parent=0 // pred_check_branch
    %9 = sbr.rel (0) target = $region5
  $region4: #{net_forward.16} parent=0 // pred_region
    _
  $region5: #{net_forward.16} parent=0 // pred_fallthru
    _
  // Predicated region
  $region6: #{net_forward.16} parent=0 // pred_check
    _
  $region7: #{net_forward.16} parent=0 // pred_check_branch
    %11 = sbr.rel (0) target = $region9
  $region8: #{net_forward.16} parent=0 // pred_region
    _
  $region9: #{net_forward.16} parent=0 // pred_fallthru
    _
  // Predicated region
  $region10: #{net_forward.16} parent=0 // pred_check
    _
  $region11: #{net_forward.16} parent=0 // pred_check_branch
    %13 = sbr.rel (0) target = $region13
  $region12: #{net_forward.16} parent=0 // pred_region
    _
  $region13: #{net_forward.16} parent=0 // pred_fallthru
    _
  %v14 = vld [vmem:[%s0] sm:$0xff]
  %v15 = vld [vmem:[%s0 + $0x8] sm:$0xff]
  %v16 = vld [vmem:[%s0 + $0x10] sm:$0x3f]
  %v17 = vld [vmem:[%s1] sm:$0xff]
  %v18 = vld [vmem:[%s1 + $0x8] sm:$0xff]
  %v19 = vld [vmem:[%s1 + $0x10] sm:$0xff]
  %v20 = vld [vmem:[%s1 + $0x18] sm:$0xff]
  %v21 = vld [vmem:[%s1 + $0x20] sm:$0xff]
  %v22 = vld [vmem:[%s1 + $0x28] sm:$0xff]
  %v23 = vld [vmem:[%s1 + $0x30] sm:$0xff]
  %v24 = vld [vmem:[%s1 + $0x38] sm:$0xff]
  %v25 = vld [vmem:[%s1 + $0x40] sm:$0xff]
  %v26 = vld [vmem:[%s1 + $0x48] sm:$0xff]
  %v27 = vld [vmem:[%s1 + $0x50] sm:$0xff]
  %v28 = vld [vmem:[%s1 + $0x58] sm:$0xff]
  %v29 = vld [vmem:[%s1 + $0x60] sm:$0xff]
  %v30 = vld [vmem:[%s1 + $0x68] sm:$0xff]
  %v31 = vld [vmem:[%s1 + $0x70] sm:$0xff]
  %v32 = vld [vmem:[%s1 + $0x78] sm:$0xff]
  %33 = vmatprep.subr.mxu0 0.0
  %34 = vmatpush1.msra.mxu0 %v17
  %35 = vmatprep.subr.mxu0 0.0
  %36 = vmatpush1.msra.mxu0 %v18
  %37 = vmatprep.subr.mxu0 0.0
  %38 = vmatpush1.msra.mxu0 %v19
  %39 = vmatprep.subr.mxu0 0.0
  %40 = vmatpush1.msra.mxu0 %v20
  %41 = vmatprep.subr.mxu0 0.0
  %42 = vmatpush1.msra.mxu0 %v21
  %43 = vmatprep.subr.mxu0 0.0
  %44 = vmatpush1.msra.mxu0 %v22
  %45 = vmatprep.subr.mxu0 0.0
  %46 = vmatpush1.msra.mxu0 %v23
  %47 = vmatprep.subr.mxu0 0.0
  %48 = vmatpush1.msra.mxu0 %v24
  %49 = vmatprep.subr.mxu0 0.0
  %50 = vmatpush1.msra.mxu0 %v25
  %51 = vmatprep.subr.mxu0 0.0
  %52 = vmatpush1.msra.mxu0 %v26
  %53 = vmatprep.subr.mxu0 0.0
  %54 = vmatpush1.msra.mxu0 %v27
  %55 = vmatprep.subr.mxu0 0.0
  %56 = vmatpush1.msra.mxu0 %v28
  %57 = vmatprep.subr.mxu0 0.0
  %58 = vmatpush1.msra.mxu0 %v29
  %59 = vmatprep.subr.mxu0 0.0
  %60 = vmatpush1.msra.mxu0 %v30
  %61 = vmatprep.subr.mxu0 0.0
  %62 = vmatpush1.msra.mxu0 %v31
  %63 = vmatprep.subr.mxu0 0.0
  %64 = vmatpush1.msra.mxu0 %v32
  %65 = vmatprep.subr.mxu0 0.0
  %66 = vmatpush1.msra.mxu0 0.0
  %67 = vmatprep.subr.mxu0 0.0
  %68 = vmatpush1.msra.mxu0 0.0
  %69 = vmatprep.subr.mxu0 0.0
  %70 = vmatpush1.msra.mxu0 0.0
  %71 = vmatprep.subr.mxu0 0.0
  %72 = vmatpush1.msra.mxu0 0.0
  %73 = vmatprep.subr.mxu0 0.0
  %74 = vmatpush1.msra.mxu0 0.0
  %75 = vmatprep.subr.mxu0 0.0
  %76 = vmatpush1.msra.mxu0 0.0
  %77 = vmatprep.subr.mxu0 0.0
  %78 = vmatpush1.msra.mxu0 0.0
  %79 = vmatprep.subr.mxu0 0.0
  %80 = vmatpush1.msra.mxu0 0.0
  %81 = vmatprep.subr.mxu0 0.0
  %82 = vmatpush1.msra.mxu0 0.0
  %83 = vmatprep.subr.mxu0 0.0
  %84 = vmatpush1.msra.mxu0 0.0
  %85 = vmatprep.subr.mxu0 0.0
  %86 = vmatpush1.msra.mxu0 0.0
  %87 = vmatprep.subr.mxu0 0.0
  %88 = vmatpush1.msra.mxu0 0.0
  %89 = vmatprep.subr.mxu0 0.0
  %90 = vmatpush1.msra.mxu0 0.0
  %91 = vmatprep.subr.mxu0 0.0
  %92 = vmatpush1.msra.mxu0 0.0
  %93 = vmatprep.subr.mxu0 0.0
  %94 = vmatpush1.msra.mxu0 0.0
  %95 = vmatprep.subr.mxu0 0.0
  %96 = vmatpush1.msra.mxu0 0.0
  %97 = vmatprep.mubr.f32.mxu0 0.0
  %98 = vmatmul.mubr.f32.gmra.mrb[0].mxu0 %v14
  %v99 = vpop.f32.mrb[0].mxu0
  %v100 = vadd.f32 0.0, %v99
  %v101 = vpop.f32.mrb[0].mxu0
  %102 = vmatprep.mubr.f32.mxu0 0.0
  %103 = vmatmul.mubr.f32.gmra.mrb[0].mxu0 %v15
  %v104 = vpop.f32.mrb[0].mxu0
  %v105 = vadd.f32 0.0, %v104
  %v106 = vpop.f32.mrb[0].mxu0
  %107 = vmatprep.mubr.f32.mxu0 0.0
  %108 = vmatmul.mubr.f32.gmra.mrb[0].mxu0 %v16
  %v109 = vpop.f32.mrb[0].mxu0
  %v110 = vadd.f32 0.0, %v109
  %v111 = vpop.f32.mrb[0].mxu0
  %112 = vdwg.mxu0
  %v113 = vld [vmem:[%s2] sm:$0xff]
  %v114 = vld [vmem:[%s2 + $0x8] sm:$0xff]
  %v115 = vld [vmem:[%s2 + $0x10] sm:$0x3f]
  %117 = vset.pattern.permute.xlu0 0
  %118 = vperm.xlu0 %117, %v113
  %v119 = vpop.permute.xlu0 %118
  %122 = vset.pattern.permute.xlu0 0
  %123 = vperm.xlu0 %122, %v114
  %v124 = vpop.permute.xlu0 %123
  %127 = vset.pattern.permute.xlu0 0
  %128 = vperm.xlu0 %127, %v115
  %v129 = vpop.permute.xlu0 %128
  %v131 = vmul.f32 %v119, %v100
  %v132 = vmul.f32 %v124, %v105
  %v133 = vmul.f32 %v129, %v110
  %134 = vst [vmem:[%s3] sm:$0xff] %v131
  %135 = vst [vmem:[%s3 + $0x8] sm:$0xff] %v132
  %136 = vst [vmem:[%s3 + $0x10] sm:$0x3f] %v133
  // Predicated region
  $region14: #{net_forward.16} parent=0 // pred_check
    _
  $region15: #{net_forward.16} parent=0 // pred_check_branch
    %138 = sbr.rel (0) target = $region17
  $region16: #{net_forward.16} parent=0 // pred_region
    _
  $region17: #{net_forward.16} parent=0 // pred_fallthru
    _
  // Predicated region
  $region18: #{net_forward.16} parent=0 // pred_check
    _
  $region19: #{net_forward.16} parent=0 // pred_check_branch
    %140 = sbr.rel (0) target = $region21
  $region20: #{net_forward.16} parent=0 // pred_region
    _
  $region21: #{net_forward.16} parent=0 // pred_fallthru
    _

// kernel: net_forward.17
$region0: #{net_forward.17}
  #allocation0 [shape = 'u32[]', space=smem, size = 0x4, offset = 0x4, fixed_abs, tag = 'smem constant byte address 0x4 - core index']
  #allocation1 [shape = 'u32[144,128]{1,0:T(1,128)}', space=vmem, size = 0x12000, scoped, tag = 'internal scratch']
  %s0 = inlined_call_operand.vmem [shape: f32[22,22], index: 0, kind: input, shape index: {}]
  %s1 = inlined_call_operand.vmem [shape: f32[22,128], index: 1, kind: input, shape index: {}, may-alias: {1,2}]
  %s2 = inlined_call_operand.vmem [shape: f32[22,128], index: 2, kind: input, shape index: {}, may-alias: {1,2}]
  %s3 = inlined_call_operand.vmem [shape: f32[22,1], index: 3, kind: input, shape index: {}]
  %s4 = inlined_call_operand.vmem [shape: f32[1,128], index: 4, kind: input, shape index: {}]
  %s5 = inlined_call_operand.vmem [shape: f32[1,128], index: 5, kind: input, shape index: {}]
  %s6 = inlined_call_operand.vmem [shape: f32[22,128], index: 6, kind: output, shape index: {0}]
  %s7 = inlined_call_operand.vmem [shape: f32[1,22], index: 7, kind: output, shape index: {1}]
  %8 = xla_tuple %s6, %s7
  %s9 = sld [smem:[#allocation0]]
  $region42: #{net_forward.17} parent=0
    _
  %s11 = ssub.s32 1, %s9
  %s12 = scalar_select 0, %s11, %s9
  // Predicated region
  $region2: #{net_forward.17} parent=0 // pred_check
    _
  $region3: #{net_forward.17} parent=0 // pred_check_branch
    %14 = sbr.rel (0) target = $region5
  $region4: #{net_forward.17} parent=0 // pred_region
    _
  $region5: #{net_forward.17} parent=0 // pred_fallthru
    _
  // Predicated region
  $region6: #{net_forward.17} parent=0 // pred_check
    _
  $region7: #{net_forward.17} parent=0 // pred_check_branch
    %16 = sbr.rel (0) target = $region9
  $region8: #{net_forward.17} parent=0 // pred_region
    _
  $region9: #{net_forward.17} parent=0 // pred_fallthru
    _
  // Predicated region
  $region10: #{net_forward.17} parent=0 // pred_check
    _
  $region11: #{net_forward.17} parent=0 // pred_check_branch
    %18 = sbr.rel (0) target = $region13
  $region12: #{net_forward.17} parent=0 // pred_region
    _
  $region13: #{net_forward.17} parent=0 // pred_fallthru
    _
  // Predicated region
  $region14: #{net_forward.17} parent=0 // pred_check
    _
  $region15: #{net_forward.17} parent=0 // pred_check_branch
    %20 = sbr.rel (0) target = $region17
  $region16: #{net_forward.17} parent=0 // pred_region
    _
  $region17: #{net_forward.17} parent=0 // pred_fallthru
    _
  // Predicated region
  $region18: #{net_forward.17} parent=0 // pred_check
    _
  $region19: #{net_forward.17} parent=0 // pred_check_branch
    %22 = sbr.rel (0) target = $region21
  $region20: #{net_forward.17} parent=0 // pred_region
    _
  $region21: #{net_forward.17} parent=0 // pred_fallthru
    _
  // Predicated region
  $region22: #{net_forward.17} parent=0 // pred_check
    _
  $region23: #{net_forward.17} parent=0 // pred_check_branch
    %24 = sbr.rel (0) target = $region25
  $region24: #{net_forward.17} parent=0 // pred_region
    _
  $region25: #{net_forward.17} parent=0 // pred_fallthru
    _
  %v25 = vld [vmem:[%s0] sm:$0xff]
  %v26 = vld [vmem:[%s0 + $0x8] sm:$0xff]
  %v27 = vld [vmem:[%s0 + $0x10] sm:$0x3f]
  %v28 = vld [vmem:[%s1] sm:$0xff]
  %v29 = vld [vmem:[%s1 + $0x8] sm:$0xff]
  %v30 = vld [vmem:[%s1 + $0x10] sm:$0x3f]
  %v31 = vld [vmem:[%s3] sm:$0xff]
  %v32 = vld [vmem:[%s3 + $0x8] sm:$0xff]
  %v33 = vld [vmem:[%s3 + $0x10] sm:$0x3f]
  %v34 = vld [vmem:[%s2] sm:$0xff]
  %v35 = vld [vmem:[%s2 + $0x8] sm:$0xff]
  %v36 = vld [vmem:[%s2 + $0x10] sm:$0x3f]
  %vm37 = vcmask 179200
  %v39 = vsel %vm37, %v25, 0
  %v42 = vsel %vm37, %v26, 0
  %v45 = vsel %vm37, %v27, 0
  %vm47 = vcmask 1045504
  %v49 = vsel %vm47, %v30, 0
  %51 = vmatprep.subr.mxu0 0.0
  %52 = vmatpush1.msra.mxu0 %v28
  %53 = vmatprep.subr.mxu0 0.0
  %54 = vmatpush1.msra.mxu0 %v29
  %55 = vmatprep.subr.mxu0 0.0
  %56 = vmatpush1.msra.mxu0 %v49
  %57 = vmatprep.subr.mxu0 0.0
  %58 = vmatpush1.msra.mxu0 0.0
  %59 = vmatprep.subr.mxu0 0.0
  %60 = vmatpush1.msra.mxu0 0.0
  %61 = vmatprep.subr.mxu0 0.0
  %62 = vmatpush1.msra.mxu0 0.0
  %63 = vmatprep.subr.mxu0 0.0
  %64 = vmatpush1.msra.mxu0 0.0
  %65 = vmatprep.subr.mxu0 0.0
  %66 = vmatpush1.msra.mxu0 0.0
  %67 = vmatprep.subr.mxu0 0.0
  %68 = vmatpush1.msra.mxu0 0.0
  %69 = vmatprep.subr.mxu0 0.0
  %70 = vmatpush1.msra.mxu0 0.0
  %71 = vmatprep.subr.mxu0 0.0
  %72 = vmatpush1.msra.mxu0 0.0
  %73 = vmatprep.subr.mxu0 0.0
  %74 = vmatpush1.msra.mxu0 0.0
  %75 = vmatprep.subr.mxu0 0.0
  %76 = vmatpush1.msra.mxu0 0.0
  %77 = vmatprep.subr.mxu0 0.0
  %78 = vmatpush1.msra.mxu0 0.0
  %79 = vmatprep.subr.mxu0 0.0
  %80 = vmatpush1.msra.mxu0 0.0
  %81 = vmatprep.subr.mxu0 0.0
  %82 = vmatpush1.msra.mxu0 0.0
  %83 = vmatprep.subr.mxu0 0.0
  %84 = vmatpush1.msra.mxu0 0.0
  %85 = vmatprep.subr.mxu0 0.0
  %86 = vmatpush1.msra.mxu0 0.0
  %87 = vmatprep.subr.mxu0 0.0
  %88 = vmatpush1.msra.mxu0 0.0
  %89 = vmatprep.subr.mxu0 0.0
  %90 = vmatpush1.msra.mxu0 0.0
  %91 = vmatprep.subr.mxu0 0.0
  %92 = vmatpush1.msra.mxu0 0.0
  %93 = vmatprep.subr.mxu0 0.0
  %94 = vmatpush1.msra.mxu0 0.0
  %95 = vmatprep.subr.mxu0 0.0
  %96 = vmatpush1.msra.mxu0 0.0
  %97 = vmatprep.subr.mxu0 0.0
  %98 = vmatpush1.msra.mxu0 0.0
  %99 = vmatprep.subr.mxu0 0.0
  %100 = vmatpush1.msra.mxu0 0.0
  %101 = vmatprep.subr.mxu0 0.0
  %102 = vmatpush1.msra.mxu0 0.0
  %103 = vmatprep.subr.mxu0 0.0
  %104 = vmatpush1.msra.mxu0 0.0
  %105 = vmatprep.subr.mxu0 0.0
  %106 = vmatpush1.msra.mxu0 0.0
  %107 = vmatprep.subr.mxu0 0.0
  %108 = vmatpush1.msra.mxu0 0.0
  %109 = vmatprep.subr.mxu0 0.0
  %110 = vmatpush1.msra.mxu0 0.0
  %111 = vmatprep.subr.mxu0 0.0
  %112 = vmatpush1.msra.mxu0 0.0
  %113 = vmatprep.subr.mxu0 0.0
  %114 = vmatpush1.msra.mxu0 0.0
  %115 = vmatprep.mubr.f32.mxu0 0.0
  %116 = vmatmul.mubr.f32.gmra.mrb[0].mxu0 %v39
  %v117 = vpop.f32.mrb[0].mxu0
  %v118 = vadd.f32 %v34, %v117
  %v119 = vpop.f32.mrb[0].mxu0
  %120 = vmatprep.mubr.f32.mxu0 0.0
  %121 = vmatmul.mubr.f32.gmra.mrb[0].mxu0 %v42
  %v122 = vpop.f32.mrb[0].mxu0
  %v123 = vadd.f32 %v35, %v122
  %v124 = vpop.f32.mrb[0].mxu0
  %125 = vmatprep.mubr.f32.mxu0 0.0
  %126 = vmatmul.mubr.f32.gmra.mrb[0].mxu0 %v45
  %v127 = vpop.f32.mrb[0].mxu0
  %v128 = vadd.f32 %v36, %v127
  %v129 = vpop.f32.mrb[0].mxu0
  %130 = vdwg.mxu0
  %132 = vset.pattern.permute.xlu0 0
  %133 = vperm.xlu0 %132, %v31
  %v134 = vpop.permute.xlu0 %133
  %137 = vset.pattern.permute.xlu0 0
  %138 = vperm.xlu0 %137, %v32
  %v139 = vpop.permute.xlu0 %138
  %142 = vset.pattern.permute.xlu0 0
  %143 = vperm.xlu0 %142, %v33
  %v144 = vpop.permute.xlu0 %143
  %v146 = vmul.f32 %v134, %v118
  %v147 = vmul.f32 %v139, %v123
  %v148 = vmul.f32 %v144, %v128
  %v149 = vld [vmem:[%s4] sm:$0x1]
  %v151 = vlaneseq
  %v152 = vshrl.u32 %v151, 7
  %v153 = vsub.s32 0, %v152
  %v154 = vrot.slane %v149, %v153
  %v156 = vadd.f32 %v146, %v154
  %v157 = vadd.f32 %v147, %v154
  %v158 = vadd.f32 %v148, %v154
  %v159 = vmax.f32 %v156, 0.0
  %v160 = vmax.f32 %v157, 0.0
  %v161 = vmax.f32 %v158, 0.0
  %162 = vst [vmem:[%s6] sm:$0xff] %v159
  %163 = vst [vmem:[%s6 + $0x8] sm:$0xff] %v160
  %164 = vst [vmem:[%s6 + $0x10] sm:$0x3f] %v161
  %v165 = vld [vmem:[%s5] sm:$0x1]
  %v166 = vmul.f32 %v165, %v165
  %vm167 = vcmask 1040384
  %v168 = vsel %vm167, %v166, 0.0
  %169 = vadd.xlane.f32.xlu0 %v168
  %v170 = vpop.xlane.xlu0 %169
  %v171 = vrot.slane %v170, 4
  %v172 = vadd.f32 %v170, %v171
  %v173 = vrot.slane %v172, 2
  %v174 = vadd.f32 %v172, %v173
  %v175 = vrot.slane %v174, 1
  %v176 = vadd.f32 %v174, %v175
  %s177 = vtos %v176
  %v178 = vstv %s177
  %v179 = vrsqrt.pop %v178
  %v181 = vlaneseq
  %v182 = vshrl.u32 %v181, 7
  %v183 = vsub.s32 0, %v182
  %v184 = vrot.slane %v165, %v183
  %186 = vmatprep.subr.mxu0 0.0
  %187 = vmatpush1.xpose.msra.mxu0 %v159
  %188 = vmatprep.subr.mxu0 0.0
  %189 = vmatpush1.xpose.msra.mxu0 %v160
  %190 = vmatprep.subr.mxu0 0.0
  %191 = vmatpush1.xpose.msra.mxu0 %v161
  %192 = vmatprep.subr.mxu0 0.0
  %193 = vmatpush1.xpose.msra.mxu0 0.0
  %194 = vmatprep.subr.mxu0 0.0
  %195 = vmatpush1.xpose.msra.mxu0 0.0
  %196 = vmatprep.subr.mxu0 0.0
  %197 = vmatpush1.xpose.msra.mxu0 0.0
  %198 = vmatprep.subr.mxu0 0.0
  %199 = vmatpush1.xpose.msra.mxu0 0.0
  %200 = vmatprep.subr.mxu0 0.0
  %201 = vmatpush1.xpose.msra.mxu0 0.0
  %202 = vmatprep.subr.mxu0 0.0
  %203 = vmatpush1.xpose.msra.mxu0 0.0
  %204 = vmatprep.subr.mxu0 0.0
  %205 = vmatpush1.xpose.msra.mxu0 0.0
  %206 = vmatprep.subr.mxu0 0.0
  %207 = vmatpush1.xpose.msra.mxu0 0.0
  %208 = vmatprep.subr.mxu0 0.0
  %209 = vmatpush1.xpose.msra.mxu0 0.0
  %210 = vmatprep.subr.mxu0 0.0
  %211 = vmatpush1.xpose.msra.mxu0 0.0
  %212 = vmatprep.subr.mxu0 0.0
  %213 = vmatpush1.xpose.msra.mxu0 0.0
  %214 = vmatprep.subr.mxu0 0.0
  %215 = vmatpush1.xpose.msra.mxu0 0.0
  %216 = vmatprep.subr.mxu0 0.0
  %217 = vmatpush1.xpose.msra.mxu0 0.0
  %218 = vmatprep.subr.mxu0 0.0
  %219 = vmatpush1.xpose.msra.mxu0 0.0
  %220 = vmatprep.subr.mxu0 0.0
  %221 = vmatpush1.xpose.msra.mxu0 0.0
  %222 = vmatprep.subr.mxu0 0.0
  %223 = vmatpush1.xpose.msra.mxu0 0.0
  %224 = vmatprep.subr.mxu0 0.0
  %225 = vmatpush1.xpose.msra.mxu0 0.0
  %226 = vmatprep.subr.mxu0 0.0
  %227 = vmatpush1.xpose.msra.mxu0 0.0
  %228 = vmatprep.subr.mxu0 0.0
  %229 = vmatpush1.xpose.msra.mxu0 0.0
  %230 = vmatprep.subr.mxu0 0.0
  %231 = vmatpush1.xpose.msra.mxu0 0.0
  %232 = vmatprep.subr.mxu0 0.0
  %233 = vmatpush1.xpose.msra.mxu0 0.0
  %234 = vmatprep.subr.mxu0 0.0
  %235 = vmatpush1.xpose.msra.mxu0 0.0
  %236 = vmatprep.subr.mxu0 0.0
  %237 = vmatpush1.xpose.msra.mxu0 0.0
  %238 = vmatprep.subr.mxu0 0.0
  %239 = vmatpush1.xpose.msra.mxu0 0.0
  %240 = vmatprep.subr.mxu0 0.0
  %241 = vmatpush1.xpose.msra.mxu0 0.0
  %242 = vmatprep.subr.mxu0 0.0
  %243 = vmatpush1.xpose.msra.mxu0 0.0
  %244 = vmatprep.subr.mxu0 0.0
  %245 = vmatpush1.xpose.msra.mxu0 0.0
  %246 = vmatprep.subr.mxu0 0.0
  %247 = vmatpush1.xpose.msra.mxu0 0.0
  %248 = vmatprep.subr.mxu0 0.0
  %249 = vmatpush1.xpose.msra.mxu0 0.0
  %250 = vmatprep.mubr.f32.mxu0 0.0
  %251 = vmatmul.mubr.f32.gmra.mrb[0].mxu0 %v184
  %v252 = vpop.f32.mrb[0].mxu0
  %v253 = vadd.f32 0.0, %v252
  %v254 = vpop.f32.mrb[0].mxu0
  %255 = vdwg.mxu0
  %v256 = vmul.f32 %v253, %v179
  %v257 = vtanh.pop %v256
  %vm258 = vcmask 172032
  %259 = vst.msk [vmem:[%s7] sm:$0x1] %vm258, %v257
  // Predicated region
  $region26: #{net_forward.17} parent=0 // pred_check
    _
  $region27: #{net_forward.17} parent=0 // pred_check_branch
    %261 = sbr.rel (0) target = $region29
  $region28: #{net_forward.17} parent=0 // pred_region
    _
  $region29: #{net_forward.17} parent=0 // pred_fallthru
    _
  // Predicated region
  $region30: #{net_forward.17} parent=0 // pred_check
    _
  $region31: #{net_forward.17} parent=0 // pred_check_branch
    %263 = sbr.rel (0) target = $region33
  $region32: #{net_forward.17} parent=0 // pred_region
    _
  $region33: #{net_forward.17} parent=0 // pred_fallthru
    _
  // Predicated region
  $region34: #{net_forward.17} parent=0 // pred_check
    _
  $region35: #{net_forward.17} parent=0 // pred_check_branch
    %265 = sbr.rel (0) target = $region37
  $region36: #{net_forward.17} parent=0 // pred_region
    _
  $region37: #{net_forward.17} parent=0 // pred_fallthru
    _
  // Predicated region
  $region38: #{net_forward.17} parent=0 // pred_check
    _
  $region39: #{net_forward.17} parent=0 // pred_check_branch
    %267 = sbr.rel (0) target = $region41
  $region40: #{net_forward.17} parent=0 // pred_region
    _
  $region41: #{net_forward.17} parent=0 // pred_fallthru
    _

// kernel: net_forward.18
$region0: #{net_forward.18}
  #allocation0 [shape = 'u32[]', space=smem, size = 0x4, offset = 0x4, fixed_abs, tag = 'smem constant byte address 0x4 - core index']
  #allocation1 [shape = 'u32[144,128]{1,0:T(1,128)}', space=vmem, size = 0x12000, scoped, tag = 'internal scratch']
  %s0 = inlined_call_operand.vmem [shape: f32[2,9,128], index: 0, kind: input, shape index: {}]
  %s1 = inlined_call_operand.vmem [shape: f32[2,256], index: 1, kind: output, shape index: {}]
  %s2 = sld [smem:[#allocation0]]
  $region14: #{net_forward.18} parent=0
    _
  %s4 = ssub.s32 1, %s2
  %s5 = scalar_select 0, %s4, %s2
  // Predicated region
  $region2: #{net_forward.18} parent=0 // pred_check
    _
  $region3: #{net_forward.18} parent=0 // pred_check_branch
    %7 = sbr.rel (0) target = $region5
  $region4: #{net_forward.18} parent=0 // pred_region
    _
  $region5: #{net_forward.18} parent=0 // pred_fallthru
    _
  %v8 = vld [vmem:[%s0] sm:$0xff]
  %v9 = vld [vmem:[%s0 + $0x8] sm:$0x1]
  %v10 = vld [vmem:[%s0 + $0x10] sm:$0xff]
  %v11 = vld [vmem:[%s0 + $0x18] sm:$0x1]
  %vm12 = vcmask 1040384
  %v13 = vsel %vm12, %v9, -inf
  %v14 = vmax.f32 %v8, %v13
  %v15 = vrot.slane %v14, 4
  %v16 = vmax.f32 %v14, %v15
  %v17 = vrot.slane %v16, 2
  %v18 = vmax.f32 %v16, %v17
  %v19 = vrot.slane %v18, 1
  %v20 = vmax.f32 %v18, %v19
  %v21 = vsel %vm12, %v11, -inf
  %v22 = vmax.f32 %v10, %v21
  %v23 = vrot.slane %v22, 4
  %v24 = vmax.f32 %v22, %v23
  %v25 = vrot.slane %v24, 2
  %v26 = vmax.f32 %v24, %v25
  %v27 = vrot.slane %v26, 1
  %v28 = vmax.f32 %v26, %v27
  %v32 = vunpack.c.l.s4 1983009808
  %v33 = vunpack.c.0.s8 %v32
  %v34 = vlaneseq
  %v35 = vshrl.u32 %v34, 7
  %v36 = vsub.s32 %v33, %v35
  %v37 = vrot.slane %v20, %v36
  %v39 = vunpack.c.l.s4 1983009808
  %v40 = vunpack.c.0.s8 %v39
  %v41 = vlaneseq
  %v42 = vshrl.u32 %v41, 7
  %v43 = vsub.s32 %v40, %v42
  %v44 = vrot.slane %v28, %v43
  %vm45 = vcmask 1044484
  %v46 = vsel %vm45, %v37, %v37
  %vm47 = vcmask 1046534
  %v48 = vsel %vm47, %v37, %v46
  %v49 = vrot.slane %v44, 7
  %vm50 = vcmask 1041409
  %v51 = vsel %vm50, %v49, %v48
  %vm52 = vcmask 1043459
  %v53 = vsel %vm52, %v49, %v51
  %vm54 = vcmask 1045509
  %v55 = vsel %vm54, %v49, %v53
  %vm56 = vcmask 1047559
  %v57 = vsel %vm56, %v49, %v55
  %59 = vst [vmem:[%s1] sm:$0x3] %v57
  %v60 = vsel %vm12, %v9, 0.0
  %v61 = vadd.f32 %v8, %v60
  %v62 = vrot.slane %v61, 4
  %v63 = vadd.f32 %v61, %v62
  %v64 = vrot.slane %v63, 2
  %v65 = vadd.f32 %v63, %v64
  %v66 = vrot.slane %v65, 1
  %v67 = vadd.f32 %v65, %v66
  %v68 = vsel %vm12, %v11, 0.0
  %v69 = vadd.f32 %v10, %v68
  %v70 = vrot.slane %v69, 4
  %v71 = vadd.f32 %v69, %v70
  %v72 = vrot.slane %v71, 2
  %v73 = vadd.f32 %v71, %v72
  %v74 = vrot.slane %v73, 1
  %v75 = vadd.f32 %v73, %v74
  %v76 = vmul.f32 %v67, 0.11111111
  %v77 = vmul.f32 %v75, 0.11111111
  %v81 = vunpack.c.l.s4 1983009808
  %v82 = vunpack.c.0.s8 %v81
  %v83 = vlaneseq
  %v84 = vshrl.u32 %v83, 7
  %v85 = vsub.s32 %v82, %v84
  %v86 = vrot.slane %v76, %v85
  %v88 = vunpack.c.l.s4 1983009808
  %v89 = vunpack.c.0.s8 %v88
  %v90 = vlaneseq
  %v91 = vshrl.u32 %v90, 7
  %v92 = vsub.s32 %v89, %v91
  %v93 = vrot.slane %v77, %v92
  %v94 = vsel %vm45, %v86, %v86
  %v95 = vsel %vm47, %v86, %v94
  %v96 = vrot.slane %v93, 7
  %v97 = vsel %vm50, %v96, %v95
  %v98 = vsel %vm52, %v96, %v97
  %v99 = vsel %vm54, %v96, %v98
  %v100 = vsel %vm56, %v96, %v99
  %102 = vst [vmem:[%s1 + $0x2] sm:$0x3] %v100
  // Predicated region
  $region6: #{net_forward.18} parent=0 // pred_check
    _
  $region7: #{net_forward.18} parent=0 // pred_check_branch
    %104 = sbr.rel (0) target = $region9
  $region8: #{net_forward.18} parent=0 // pred_region
    _
  $region9: #{net_forward.18} parent=0 // pred_fallthru
    _
  // Predicated region
  $region10: #{net_forward.18} parent=0 // pred_check
    _
  $region11: #{net_forward.18} parent=0 // pred_check_branch
    %106 = sbr.rel (0) target = $region13
  $region12: #{net_forward.18} parent=0 // pred_region
    _
  $region13: #{net_forward.18} parent=0 // pred_fallthru
    _

// kernel: net_forward.12
$region0: #{net_forward.12}
  #allocation0 [shape = 'u32[]', space=smem, size = 0x4, offset = 0x4, fixed_abs, tag = 'smem constant byte address 0x4 - core index']
  #allocation1 [shape = 'u32[144,128]{1,0:T(1,128)}', space=vmem, size = 0x12000, scoped, tag = 'internal scratch']
  %s0 = inlined_call_operand.vmem [shape: f32[2,13,128], index: 0, kind: input, shape index: {}]
  %s1 = inlined_call_operand.vmem [shape: f32[2,256], index: 1, kind: output, shape index: {}]
  %s2 = sld [smem:[#allocation0]]
  $region14: #{net_forward.12} parent=0
    _
  %s4 = ssub.s32 1, %s2
  %s5 = scalar_select 0, %s4, %s2
  // Predicated region
  $region2: #{net_forward.12} parent=0 // pred_check
    _
  $region3: #{net_forward.12} parent=0 // pred_check_branch
    %7 = sbr.rel (0) target = $region5
  $region4: #{net_forward.12} parent=0 // pred_region
    _
  $region5: #{net_forward.12} parent=0 // pred_fallthru
    _
  %v8 = vld [vmem:[%s0] sm:$0xff]
  %v9 = vld [vmem:[%s0 + $0x8] sm:$0x1f]
  %v10 = vld [vmem:[%s0 + $0x10] sm:$0xff]
  %v11 = vld [vmem:[%s0 + $0x18] sm:$0x1f]
  %vm12 = vcmask 1044480
  %v13 = vsel %vm12, %v9, -inf
  %v14 = vmax.f32 %v8, %v13
  %v15 = vrot.slane %v14, 4
  %v16 = vmax.f32 %v14, %v15
  %v17 = vrot.slane %v16, 2
  %v18 = vmax.f32 %v16, %v17
  %v19 = vrot.slane %v18, 1
  %v20 = vmax.f32 %v18, %v19
  %v21 = vsel %vm12, %v11, -inf
  %v22 = vmax.f32 %v10, %v21
  %v23 = vrot.slane %v22, 4
  %v24 = vmax.f32 %v22, %v23
  %v25 = vrot.slane %v24, 2
  %v26 = vmax.f32 %v24, %v25
  %v27 = vrot.slane %v26, 1
  %v28 = vmax.f32 %v26, %v27
  %v32 = vunpack.c.l.s4 1983009808
  %v33 = vunpack.c.0.s8 %v32
  %v34 = vlaneseq
  %v35 = vshrl.u32 %v34, 7
  %v36 = vsub.s32 %v33, %v35
  %v37 = vrot.slane %v20, %v36
  %v39 = vunpack.c.l.s4 1983009808
  %v40 = vunpack.c.0.s8 %v39
  %v41 = vlaneseq
  %v42 = vshrl.u32 %v41, 7
  %v43 = vsub.s32 %v40, %v42
  %v44 = vrot.slane %v28, %v43
  %vm45 = vcmask 1044484
  %v46 = vsel %vm45, %v37, %v37
  %vm47 = vcmask 1046534
  %v48 = vsel %vm47, %v37, %v46
  %v49 = vrot.slane %v44, 7
  %vm50 = vcmask 1041409
  %v51 = vsel %vm50, %v49, %v48
  %vm52 = vcmask 1043459
  %v53 = vsel %vm52, %v49, %v51
  %vm54 = vcmask 1045509
  %v55 = vsel %vm54, %v49, %v53
  %vm56 = vcmask 1047559
  %v57 = vsel %vm56, %v49, %v55
  %59 = vst [vmem:[%s1] sm:$0x3] %v57
  %v60 = vsel %vm12, %v9, 0.0
  %v61 = vadd.f32 %v8, %v60
  %v62 = vrot.slane %v61, 4
  %v63 = vadd.f32 %v61, %v62
  %v64 = vrot.slane %v63, 2
  %v65 = vadd.f32 %v63, %v64
  %v66 = vrot.slane %v65, 1
  %v67 = vadd.f32 %v65, %v66
  %v68 = vsel %vm12, %v11, 0.0
  %v69 = vadd.f32 %v10, %v68
  %v70 = vrot.slane %v69, 4
  %v71 = vadd.f32 %v69, %v70
  %v72 = vrot.slane %v71, 2
  %v73 = vadd.f32 %v71, %v72
  %v74 = vrot.slane %v73, 1
  %v75 = vadd.f32 %v73, %v74
  %v76 = vmul.f32 %v67, 0.07692308
  %v77 = vmul.f32 %v75, 0.07692308
  %v81 = vunpack.c.l.s4 1983009808
  %v82 = vunpack.c.0.s8 %v81
  %v83 = vlaneseq
  %v84 = vshrl.u32 %v83, 7
  %v85 = vsub.s32 %v82, %v84
  %v86 = vrot.slane %v76, %v85
  %v88 = vunpack.c.l.s4 1983009808
  %v89 = vunpack.c.0.s8 %v88
  %v90 = vlaneseq
  %v91 = vshrl.u32 %v90, 7
  %v92 = vsub.s32 %v89, %v91
  %v93 = vrot.slane %v77, %v92
  %v94 = vsel %vm45, %v86, %v86
  %v95 = vsel %vm47, %v86, %v94
  %v96 = vrot.slane %v93, 7
  %v97 = vsel %vm50, %v96, %v95
  %v98 = vsel %vm52, %v96, %v97
  %v99 = vsel %vm54, %v96, %v98
  %v100 = vsel %vm56, %v96, %v99
  %102 = vst [vmem:[%s1 + $0x2] sm:$0x3] %v100
  // Predicated region
  $region6: #{net_forward.12} parent=0 // pred_check
    _
  $region7: #{net_forward.12} parent=0 // pred_check_branch
    %104 = sbr.rel (0) target = $region9
  $region8: #{net_forward.12} parent=0 // pred_region
    _
  $region9: #{net_forward.12} parent=0 // pred_fallthru
    _
  // Predicated region
  $region10: #{net_forward.12} parent=0 // pred_check
    _
  $region11: #{net_forward.12} parent=0 // pred_check_branch
    %106 = sbr.rel (0) target = $region13
  $region12: #{net_forward.12} parent=0 // pred_region
    _
  $region13: #{net_forward.12} parent=0 // pred_fallthru
    _

// kernel: net_forward.19
$region0: #{net_forward.19}
  #allocation0 [shape = 'u32[]', space=smem, size = 0x4, offset = 0x4, fixed_abs, tag = 'smem constant byte address 0x4 - core index']
  #allocation1 [shape = 'u32[144,128]{1,0:T(1,128)}', space=vmem, size = 0x12000, scoped, tag = 'internal scratch']
  #allocation2 [shape = 'f32[1,1]{1,0:T(1,128)S(1)}', space=vmem, size = 0x200, scoped, tag = 'scoped memory for net_forward.19']
  %s0 = inlined_call_operand.vmem [shape: f32[2,256], index: 0, kind: input, shape index: {}]
  %s1 = inlined_call_operand.vmem [shape: f32[256,128], index: 1, kind: input, shape index: {}]
  %s2 = inlined_call_operand.vmem [shape: f32[1,128], index: 2, kind: input, shape index: {}]
  %s3 = inlined_call_operand.vmem [shape: f32[128,64], index: 3, kind: input, shape index: {}]
  %s4 = inlined_call_operand.vmem [shape: f32[1,64], index: 4, kind: input, shape index: {}]
  %s5 = inlined_call_operand.vmem [shape: f32[1,64], index: 5, kind: input, shape index: {}]
  %s6 = inlined_call_operand.<no memory space> [shape: f32[1,1], index: 6, kind: input, shape index: {}]
  %s7 = inlined_call_operand.vmem [shape: f32[2,1], index: 7, kind: output, shape index: {}]
  %s8 = sld [smem:[#allocation0]]
  $region38: #{net_forward.19} parent=0
    _
  %s10 = ssub.s32 1, %s8
  %s11 = scalar_select 0, %s10, %s8
  %v12 = vstv %s6
  %13 = vst [vmem:[#allocation2] sm:$0x1] %v12
  // Predicated region
  $region2: #{net_forward.19} parent=0 // pred_check
    _
  $region3: #{net_forward.19} parent=0 // pred_check_branch
    %15 = sbr.rel (0) target = $region5
  $region4: #{net_forward.19} parent=0 // pred_region
    _
  $region5: #{net_forward.19} parent=0 // pred_fallthru
    _
  // Predicated region
  $region6: #{net_forward.19} parent=0 // pred_check
    _
  $region7: #{net_forward.19} parent=0 // pred_check_branch
    %17 = sbr.rel (0) target = $region9
  $region8: #{net_forward.19} parent=0 // pred_region
    _
  $region9: #{net_forward.19} parent=0 // pred_fallthru
    _
  // Predicated region
  $region10: #{net_forward.19} parent=0 // pred_check
    _
  $region11: #{net_forward.19} parent=0 // pred_check_branch
    %19 = sbr.rel (0) target = $region13
  $region12: #{net_forward.19} parent=0 // pred_region
    _
  $region13: #{net_forward.19} parent=0 // pred_fallthru
    _
  // Predicated region
  $region14: #{net_forward.19} parent=0 // pred_check
    _
  $region15: #{net_forward.19} parent=0 // pred_check_branch
    %21 = sbr.rel (0) target = $region17
  $region16: #{net_forward.19} parent=0 // pred_region
    _
  $region17: #{net_forward.19} parent=0 // pred_fallthru
    _
  // Predicated region
  $region18: #{net_forward.19} parent=0 // pred_check
    _
  $region19: #{net_forward.19} parent=0 // pred_check_branch
    %23 = sbr.rel (0) target = $region21
  $region20: #{net_forward.19} parent=0 // pred_region
    _
  $region21: #{net_forward.19} parent=0 // pred_fallthru
    _
  // Predicated region
  $region22: #{net_forward.19} parent=0 // pred_check
    _
  $region23: #{net_forward.19} parent=0 // pred_check_branch
    %25 = sbr.rel (0) target = $region25
  $region24: #{net_forward.19} parent=0 // pred_region
    _
  $region25: #{net_forward.19} parent=0 // pred_fallthru
    _
  // Predicated region
  $region26: #{net_forward.19} parent=0 // pred_check
    _
  $region27: #{net_forward.19} parent=0 // pred_check_branch
    %27 = sbr.rel (0) target = $region29
  $region28: #{net_forward.19} parent=0 // pred_region
    _
  $region29: #{net_forward.19} parent=0 // pred_fallthru
    _
  %v28 = vld [vmem:[%s0] sm:$0xf]
  %v29 = vld [vmem:[%s1] sm:$0xff]
  %v30 = vld [vmem:[%s1 + $0x8] sm:$0xff]
  %v31 = vld [vmem:[%s1 + $0x10] sm:$0xff]
  %v32 = vld [vmem:[%s1 + $0x18] sm:$0xff]
  %v33 = vld [vmem:[%s1 + $0x20] sm:$0xff]
  %v34 = vld [vmem:[%s1 + $0x28] sm:$0xff]
  %v35 = vld [vmem:[%s1 + $0x30] sm:$0xff]
  %v36 = vld [vmem:[%s1 + $0x38] sm:$0xff]
  %v37 = vld [vmem:[%s1 + $0x40] sm:$0xff]
  %v38 = vld [vmem:[%s1 + $0x48] sm:$0xff]
  %v39 = vld [vmem:[%s1 + $0x50] sm:$0xff]
  %v40 = vld [vmem:[%s1 + $0x58] sm:$0xff]
  %v41 = vld [vmem:[%s1 + $0x60] sm:$0xff]
  %v42 = vld [vmem:[%s1 + $0x68] sm:$0xff]
  %v43 = vld [vmem:[%s1 + $0x70] sm:$0xff]
  %v44 = vld [vmem:[%s1 + $0x78] sm:$0xff]
  %v45 = vld [vmem:[%s1 + $0x80] sm:$0xff]
  %v46 = vld [vmem:[%s1 + $0x88] sm:$0xff]
  %v47 = vld [vmem:[%s1 + $0x90] sm:$0xff]
  %v48 = vld [vmem:[%s1 + $0x98] sm:$0xff]
  %v49 = vld [vmem:[%s1 + $0xa0] sm:$0xff]
  %v50 = vld [vmem:[%s1 + $0xa8] sm:$0xff]
  %v51 = vld [vmem:[%s1 + $0xb0] sm:$0xff]
  %v52 = vld [vmem:[%s1 + $0xb8] sm:$0xff]
  %v53 = vld [vmem:[%s1 + $0xc0] sm:$0xff]
  %v54 = vld [vmem:[%s1 + $0xc8] sm:$0xff]
  %v55 = vld [vmem:[%s1 + $0xd0] sm:$0xff]
  %v56 = vld [vmem:[%s1 + $0xd8] sm:$0xff]
  %v57 = vld [vmem:[%s1 + $0xe0] sm:$0xff]
  %v58 = vld [vmem:[%s1 + $0xe8] sm:$0xff]
  %v59 = vld [vmem:[%s1 + $0xf0] sm:$0xff]
  %v60 = vld [vmem:[%s1 + $0xf8] sm:$0xff]
  %v61 = vld [vmem:[%s2] sm:$0x1]
  %v63 = vlaneseq
  %v64 = vshrl.u32 %v63, 7
  %v65 = vsub.s32 0, %v64
  %v66 = vrot.slane %v61, %v65
  %v70 = vunpack.c.l.s4 1983009808
  %v71 = vunpack.c.0.s8 %v70
  %v72 = vlaneseq
  %v73 = vshrl.u32 %v72, 7
  %v74 = vsub.s32 %v71, %v73
  %v75 = vrot.slane %v28, %v74
  %v76 = vcombine.high %v75, %v75
  %79 = vmatprep.subr.mxu0 0.0
  %80 = vmatpush1.msra.mxu0 %v29
  %81 = vmatprep.subr.mxu0 0.0
  %82 = vmatpush1.msra.mxu0 %v30
  %83 = vmatprep.subr.mxu0 0.0
  %84 = vmatpush1.msra.mxu0 %v31
  %85 = vmatprep.subr.mxu0 0.0
  %86 = vmatpush1.msra.mxu0 %v32
  %87 = vmatprep.subr.mxu0 0.0
  %88 = vmatpush1.msra.mxu0 %v33
  %89 = vmatprep.subr.mxu0 0.0
  %90 = vmatpush1.msra.mxu0 %v34
  %91 = vmatprep.subr.mxu0 0.0
  %92 = vmatpush1.msra.mxu0 %v35
  %93 = vmatprep.subr.mxu0 0.0
  %94 = vmatpush1.msra.mxu0 %v36
  %95 = vmatprep.subr.mxu0 0.0
  %96 = vmatpush1.msra.mxu0 %v37
  %97 = vmatprep.subr.mxu0 0.0
  %98 = vmatpush1.msra.mxu0 %v38
  %99 = vmatprep.subr.mxu0 0.0
  %100 = vmatpush1.msra.mxu0 %v39
  %101 = vmatprep.subr.mxu0 0.0
  %102 = vmatpush1.msra.mxu0 %v40
  %103 = vmatprep.subr.mxu0 0.0
  %104 = vmatpush1.msra.mxu0 %v41
  %105 = vmatprep.subr.mxu0 0.0
  %106 = vmatpush1.msra.mxu0 %v42
  %107 = vmatprep.subr.mxu0 0.0
  %108 = vmatpush1.msra.mxu0 %v43
  %109 = vmatprep.subr.mxu0 0.0
  %110 = vmatpush1.msra.mxu0 %v44
  %111 = vmatprep.subr.mxu0 0.0
  %112 = vmatpush1.msra.mxu0 %v45
  %113 = vmatprep.subr.mxu0 0.0
  %114 = vmatpush1.msra.mxu0 %v46
  %115 = vmatprep.subr.mxu0 0.0
  %116 = vmatpush1.msra.mxu0 %v47
  %117 = vmatprep.subr.mxu0 0.0
  %118 = vmatpush1.msra.mxu0 %v48
  %119 = vmatprep.subr.mxu0 0.0
  %120 = vmatpush1.msra.mxu0 %v49
  %121 = vmatprep.subr.mxu0 0.0
  %122 = vmatpush1.msra.mxu0 %v50
  %123 = vmatprep.subr.mxu0 0.0
  %124 = vmatpush1.msra.mxu0 %v51
  %125 = vmatprep.subr.mxu0 0.0
  %126 = vmatpush1.msra.mxu0 %v52
  %127 = vmatprep.subr.mxu0 0.0
  %128 = vmatpush1.msra.mxu0 %v53
  %129 = vmatprep.subr.mxu0 0.0
  %130 = vmatpush1.msra.mxu0 %v54
  %131 = vmatprep.subr.mxu0 0.0
  %132 = vmatpush1.msra.mxu0 %v55
  %133 = vmatprep.subr.mxu0 0.0
  %134 = vmatpush1.msra.mxu0 %v56
  %135 = vmatprep.subr.mxu0 0.0
  %136 = vmatpush1.msra.mxu0 %v57
  %137 = vmatprep.subr.mxu0 0.0
  %138 = vmatpush1.msra.mxu0 %v58
  %139 = vmatprep.subr.mxu0 0.0
  %140 = vmatpush1.msra.mxu0 %v59
  %141 = vmatprep.subr.mxu0 0.0
  %142 = vmatpush1.msra.mxu0 %v60
  %143 = vmatprep.mubr.f32.mxu0 %v76
  %144 = vmatmul.mubr.f32.gmra.mrb[0].mxu0 %v75
  %v145 = vpop.f32.mrb[0].mxu0
  %v146 = vadd.f32 %v66, %v145
  %v147 = vpop.f32.mrb[0].mxu0
  %148 = vdwg.mxu0
  %v149 = vmax.f32 %v146, 0.0
  %v150 = vld [vmem:[%s3] sm:$0xff]
  %v151 = vld [vmem:[%s3 + $0x8] sm:$0xff]
  %v152 = vld [vmem:[%s3 + $0x10] sm:$0xff]
  %v153 = vld [vmem:[%s3 + $0x18] sm:$0xff]
  %v154 = vld [vmem:[%s3 + $0x20] sm:$0xff]
  %v155 = vld [vmem:[%s3 + $0x28] sm:$0xff]
  %v156 = vld [vmem:[%s3 + $0x30] sm:$0xff]
  %v157 = vld [vmem:[%s3 + $0x38] sm:$0xff]
  %v158 = vld [vmem:[%s3 + $0x40] sm:$0xff]
  %v159 = vld [vmem:[%s3 + $0x48] sm:$0xff]
  %v160 = vld [vmem:[%s3 + $0x50] sm:$0xff]
  %v161 = vld [vmem:[%s3 + $0x58] sm:$0xff]
  %v162 = vld [vmem:[%s3 + $0x60] sm:$0xff]
  %v163 = vld [vmem:[%s3 + $0x68] sm:$0xff]
  %v164 = vld [vmem:[%s3 + $0x70] sm:$0xff]
  %v165 = vld [vmem:[%s3 + $0x78] sm:$0xff]
  %v166 = vld [vmem:[%s4] sm:$0x1]
  %v168 = vlaneseq
  %v169 = vshrl.u32 %v168, 7
  %v170 = vsub.s32 0, %v169
  %v171 = vrot.slane %v166, %v170
  %173 = vmatprep.subr.mxu0 0.0
  %174 = vmatpush1.msra.mxu0 %v150
  %175 = vmatprep.subr.mxu0 0.0
  %176 = vmatpush1.msra.mxu0 %v151
  %177 = vmatprep.subr.mxu0 0.0
  %178 = vmatpush1.msra.mxu0 %v152
  %179 = vmatprep.subr.mxu0 0.0
  %180 = vmatpush1.msra.mxu0 %v153
  %181 = vmatprep.subr.mxu0 0.0
  %182 = vmatpush1.msra.mxu0 %v154
  %183 = vmatprep.subr.mxu0 0.0
  %184 = vmatpush1.msra.mxu0 %v155
  %185 = vmatprep.subr.mxu0 0.0
  %186 = vmatpush1.msra.mxu0 %v156
  %187 = vmatprep.subr.mxu0 0.0
  %188 = vmatpush1.msra.mxu0 %v157
  %189 = vmatprep.subr.mxu0 0.0
  %190 = vmatpush1.msra.mxu0 %v158
  %191 = vmatprep.subr.mxu0 0.0
  %192 = vmatpush1.msra.mxu0 %v159
  %193 = vmatprep.subr.mxu0 0.0
  %194 = vmatpush1.msra.mxu0 %v160
  %195 = vmatprep.subr.mxu0 0.0
  %196 = vmatpush1.msra.mxu0 %v161
  %197 = vmatprep.subr.mxu0 0.0
  %198 = vmatpush1.msra.mxu0 %v162
  %199 = vmatprep.subr.mxu0 0.0
  %200 = vmatpush1.msra.mxu0 %v163
  %201 = vmatprep.subr.mxu0 0.0
  %202 = vmatpush1.msra.mxu0 %v164
  %203 = vmatprep.subr.mxu0 0.0
  %204 = vmatpush1.msra.mxu0 %v165
  %205 = vmatprep.subr.mxu0 0.0
  %206 = vmatpush1.msra.mxu0 0.0
  %207 = vmatprep.subr.mxu0 0.0
  %208 = vmatpush1.msra.mxu0 0.0
  %209 = vmatprep.subr.mxu0 0.0
  %210 = vmatpush1.msra.mxu0 0.0
  %211 = vmatprep.subr.mxu0 0.0
  %212 = vmatpush1.msra.mxu0 0.0
  %213 = vmatprep.subr.mxu0 0.0
  %214 = vmatpush1.msra.mxu0 0.0
  %215 = vmatprep.subr.mxu0 0.0
  %216 = vmatpush1.msra.mxu0 0.0
  %217 = vmatprep.subr.mxu0 0.0
  %218 = vmatpush1.msra.mxu0 0.0
  %219 = vmatprep.subr.mxu0 0.0
  %220 = vmatpush1.msra.mxu0 0.0
  %221 = vmatprep.subr.mxu0 0.0
  %222 = vmatpush1.msra.mxu0 0.0
  %223 = vmatprep.subr.mxu0 0.0
  %224 = vmatpush1.msra.mxu0 0.0
  %225 = vmatprep.subr.mxu0 0.0
  %226 = vmatpush1.msra.mxu0 0.0
  %227 = vmatprep.subr.mxu0 0.0
  %228 = vmatpush1.msra.mxu0 0.0
  %229 = vmatprep.subr.mxu0 0.0
  %230 = vmatpush1.msra.mxu0 0.0
  %231 = vmatprep.subr.mxu0 0.0
  %232 = vmatpush1.msra.mxu0 0.0
  %233 = vmatprep.subr.mxu0 0.0
  %234 = vmatpush1.msra.mxu0 0.0
  %235 = vmatprep.subr.mxu0 0.0
  %236 = vmatpush1.msra.mxu0 0.0
  %237 = vmatprep.mubr.f32.mxu0 0.0
  %238 = vmatmul.mubr.f32.gmra.mrb[0].mxu0 %v149
  %v239 = vpop.f32.mrb[0].mxu0
  %v240 = vadd.f32 %v171, %v239
  %v241 = vpop.f32.mrb[0].mxu0
  %242 = vdwg.mxu0
  %v243 = vmax.f32 %v240, 0.0
  %v244 = vld [vmem:[%s5] sm:$0x1]
  %v246 = vlaneseq
  %v247 = vshrl.u32 %v246, 7
  %v248 = vsub.s32 0, %v247
  %v249 = vrot.slane %v244, %v248
  %v251 = vmul.f32 %v243, %v249
  %vm252 = vcmask 517120
  %v253 = vsel %vm252, %v251, 0.0
  %254 = vadd.xlane.f32.xlu0 %v253
  %v255 = vpop.xlane.xlu0 %254
  %v256 = vld [vmem:[#allocation2] sm:$0x1]
  %v258 = vlaneseq
  %v259 = vshrl.u32 %v258, 7
  %v260 = vsub.s32 0, %v259
  %v261 = vrot.slane %v256, %v260
  %v263 = vadd.f32 %v255, %v261
  %vm264 = vcmask 1024
  %265 = vst.msk [vmem:[%s7] sm:$0x3] %vm264, %v263
  // Predicated region
  $region30: #{net_forward.19} parent=0 // pred_check
    _
  $region31: #{net_forward.19} parent=0 // pred_check_branch
    %267 = sbr.rel (0) target = $region33
  $region32: #{net_forward.19} parent=0 // pred_region
    _
  $region33: #{net_forward.19} parent=0 // pred_fallthru
    _
  // Predicated region
  $region34: #{net_forward.19} parent=0 // pred_check
    _
  $region35: #{net_forward.19} parent=0 // pred_check_branch
    %269 = sbr.rel (0) target = $region37
  $region36: #{net_forward.19} parent=0 // pred_region
    _
  $region37: #{net_forward.19} parent=0 // pred_fallthru
    _

</llo_original>
